<compile_context>
chip_gen: v7x
topology: tpu7x:2x2x1
jax: 0.10.0
libtpu: 0.0.40
codegen_flags: <defaults>
</compile_context>

<pallas_src>
import functools
import math

import jax
import jax.numpy as jnp
from jax.experimental import pallas as pl
from jax.experimental.pallas import tpu as pltpu


def _round_up(x, m):
    return ((x + m - 1) // m) * m


def _pad2d(x, rows, cols):
    r, c = x.shape
    if r == rows and c == cols:
        return x
    return jnp.pad(x, ((0, rows - r), (0, cols - c)))


# dtype itemsize -> required sublane multiple for second-minor block dims.
_SUBLANE = {4: 8, 2: 16, 1: 32}


def _flash_attn_kernel(q_ref, k_ref, v_ref, o_ref, m_sc, l_sc, acc_sc, q_sc,
                       *, scale, compute_dtype, n_valid_last, tk):
    kv = pl.program_id(1)
    last = pl.num_programs(1) - 1

    @pl.when(kv == 0)
    def _init():
        m_sc[...] = jnp.full(m_sc.shape, -jnp.inf, jnp.float32)
        l_sc[...] = jnp.zeros(l_sc.shape, jnp.float32)
        acc_sc[...] = jnp.zeros(acc_sc.shape, jnp.float32)
        # Scale Q once per query tile (f32 math), cache it in the MXU dtype.
        q_sc[...] = (q_ref[...].astype(jnp.float32)
                     * jnp.float32(scale)).astype(q_sc.dtype)

    q = q_sc[...]                                   # [tq, d]  compute dtype
    k = k_ref[...].astype(compute_dtype)            # [tk, d]

    # scores = (Q*scale) @ K^T as transposed-RHS contraction (no XLU transpose).
    s = jax.lax.dot_general(
        q, k,
        dimension_numbers=(((1,), (1,)), ((), ())),
        preferred_element_type=jnp.float32)          # [tq, tk] f32

    if n_valid_last is not None:
        # Additive -inf-style bias for padded key columns; only the LAST kv
        # tile carries padding, so gate the [1, tk] bias by a scalar instead
        # of doing a full [tq, tk] select every step.
        col = jax.lax.broadcasted_iota(jnp.int32, (1, tk), 1)
        neg = jnp.where(col < n_valid_last, 0.0, -1e30).astype(jnp.float32)
        gate = (kv == last).astype(jnp.float32)
        s = s + gate * neg

    m_prev = m_sc[...]
    m_new = jnp.maximum(m_prev, jnp.max(s, axis=-1, keepdims=True))
    alpha = jnp.exp(m_prev - m_new)
    p = jnp.exp(s - m_new)                           # [tq, tk] f32

    l_sc[...] = alpha * l_sc[...] + jnp.sum(p, axis=-1, keepdims=True)
    acc_sc[...] = alpha * acc_sc[...] + jnp.dot(
        p.astype(compute_dtype), v_ref[...].astype(compute_dtype),
        preferred_element_type=jnp.float32)          # [tq, dv] f32
    m_sc[...] = m_new

    @pl.when(kv == last)
    def _finalize():
        inv_l = pl.reciprocal(l_sc[...], approx=True)
        o_ref[...] = (acc_sc[...] * inv_l).astype(o_ref.dtype)


def attention(queries, keys, values, *, tq=None, tk=None,
              use_bf16_matmul=False, vmem_budget_bytes=20 * 1024 * 1024):
    """Pallas TPU implementation of Attention.forward (2-D Q/K/V)."""
    M, d = queries.shape
    N, d_k = keys.shape
    assert d == d_k, "queries / keys feature dims must match"
    N_v, dv = values.shape
    assert N_v == N, "keys / values must share the sequence dim"

    in_dtype = queries.dtype
    isz = jnp.dtype(in_dtype).itemsize
    compute_dtype = (jnp.bfloat16
                     if (use_bf16_matmul and in_dtype == jnp.float32)
                     else in_dtype)
    csz = jnp.dtype(compute_dtype).itemsize
    sub = max(_SUBLANE[isz], _SUBLANE[csz])          # dtype-aware sublane align

    dp = _round_up(d, 128)
    dvp = _round_up(dv, 128)
    scale = 1.0 / math.sqrt(d)

    def footprint(tq_, tk_):
        return (2 * tq_ * dp * isz                    # Q (double-buffered)
                + 2 * tk_ * (dp + dvp) * isz          # K + V (double-buffered)
                + 2 * tq_ * dvp * isz                 # output (double-buffered)
                + tq_ * dvp * 4                       # f32 accumulator
                + 2 * tq_ * 128 * 4                   # m / l (lane-padded)
                + tq_ * dp * csz)                     # cached scaled Q

    # ---- query tile --------------------------------------------------------
    m_align = _round_up(M, sub)
    tq = min(512 if tq is None else tq, m_align)
    tq = _round_up(tq, sub)

    # ---- key tile: prefer fully-resident K/V (constant index map => K/V are
    # DMA'd from HBM exactly once for the whole kernel) -----------------------
    n_align = _round_up(N, sub)
    if tk is None:
        tk = n_align if footprint(tq, n_align) <= vmem_budget_bytes else 1024
    tk = min(_round_up(tk, sub), n_align)

    while footprint(tq, tk) > vmem_budget_bytes and tk > 2 * sub:
        tk = _round_up(tk // 2, sub)
    while footprint(tq, tk) > vmem_budget_bytes and tq > 2 * sub:
        tq = _round_up(tq // 2, sub)

    kv_resident = tk >= n_align

    # Keep >= 2 query tiles when K/V are resident so the "parallel" axis can
    # split across both TensorCores on v7x (near-free on single-TC chips).
    if kv_resident and M >= 2 * sub and _round_up(M, tq) // tq < 2:
        tq = _round_up(-(-M // 2), sub)

    Mp = _round_up(M, tq)
    Np = _round_up(N, tk)

    q = _pad2d(queries, Mp, dp)
    k = _pad2d(keys, Np, dp)
    v = _pad2d(values, Np, dvp)

    n_valid_last = None if Np == N else N - (Np // tk - 1) * tk

    grid = (Mp // tq, Np // tk)
    kernel = functools.partial(
        _flash_attn_kernel, scale=scale, compute_dtype=compute_dtype,
        n_valid_last=n_valid_last, tk=tk)

    kv_passes = 1 if kv_resident else (Mp // tq)
    cost = pl.CostEstimate(
        flops=int(2 * Mp * Np * (dp + dvp)),
        transcendentals=int(Mp * Np),
        bytes_accessed=int(Mp * dp * isz
                           + kv_passes * Np * (dp + dvp) * isz
                           + Mp * dvp * isz))

    out = pl.pallas_call(
        kernel,
        out_shape=jax.ShapeDtypeStruct((Mp, dvp), in_dtype),
        grid_spec=pltpu.PrefetchScalarGridSpec(
            num_scalar_prefetch=0,
            grid=grid,
            in_specs=[
                pl.BlockSpec((tq, dp), lambda qi, ki: (qi, 0)),    # Q resident per row tile
                pl.BlockSpec((tk, dp), lambda qi, ki: (ki, 0)),    # K streamed / resident
                pl.BlockSpec((tk, dvp), lambda qi, ki: (ki, 0)),   # V streamed / resident
            ],
            out_specs=pl.BlockSpec((tq, dvp), lambda qi, ki: (qi, 0)),
            scratch_shapes=[
                pltpu.VMEM((tq, 1), jnp.float32),     # running max m
                pltpu.VMEM((tq, 1), jnp.float32),     # running sum l
                pltpu.VMEM((tq, dvp), jnp.float32),   # output accumulator
                pltpu.VMEM((tq, dp), compute_dtype),  # cached scaled Q
            ],
        ),
        compiler_params=pltpu.CompilerParams(
            dimension_semantics=("parallel", "arbitrary"),
            vmem_limit_bytes=32 * 1024 * 1024,
        ),
        cost_estimate=cost,
    )(q, k, v)

    if (Mp, dvp) != (M, dv):
        out = out[:M, :dv]
    return out


def _attention_ref(queries, keys, values):
    d = queries.shape[-1]
    scores = jnp.matmul(queries, keys.T) / math.sqrt(d)
    scores = jax.nn.softmax(scores, axis=1)
    return jnp.matmul(scores, values)


if __name__ == "__main__":
    key = jax.random.PRNGKey(0)
    kq, kk, kv_, kr = jax.random.split(key, 4)

    # Case 1: lane-dense shapes, exact (native-f32) MXU path.
    M, N, d, dv = 256, 512, 128, 128
    q1 = jax.random.normal(kq, (M, d), dtype=jnp.float32)
    k1 = jax.random.normal(kk, (N, d), dtype=jnp.float32)
    v1 = jax.random.normal(kv_, (N, dv), dtype=jnp.float32)

    out1 = jax.block_until_ready(attention(q1, k1, v1))
    ref1 = _attention_ref(q1, k1, v1)
    assert out1.shape == (M, dv)
    err1 = float(jnp.max(jnp.abs(out1 - ref1)))
    assert jnp.allclose(out1, ref1, atol=2e-2, rtol=2e-2), f"f32 path mismatch, max_err={err1}"

    # Case 2: same data through the bf16-MXU fast path (looser tolerance).
    out2 = jax.block_until_ready(attention(q1, k1, v1, use_bf16_matmul=True))
    err2 = float(jnp.max(jnp.abs(out2 - ref1)))
    assert err2 < 1e-1, f"bf16 path mismatch, max_err={err2}"

    # Case 3: ragged / unaligned shapes (exercises padding + last-tile key mask).
    M3, N3, d3, dv3 = 100, 77, 40, 24
    q3 = jax.random.normal(kr, (M3, d3), dtype=jnp.float32)
    k3 = jax.random.normal(kk, (N3, d3), dtype=jnp.float32)
    v3 = jax.random.normal(kv_, (N3, dv3), dtype=jnp.float32)
    out3 = jax.block_until_ready(attention(q3, k3, v3))
    ref3 = _attention_ref(q3, k3, v3)
    assert out3.shape == (M3, dv3)
    err3 = float(jnp.max(jnp.abs(out3 - ref3)))
    assert jnp.allclose(out3, ref3, atol=2e-2, rtol=2e-2), f"ragged mismatch, max_err={err3}"

    print("KERNEL_OK")
</pallas_src>

<mosaic_0001>
module attributes {stable_mosaic.version = 11 : i64} {
  func.func @_flash_attn_kernel(%arg0: i32, %arg1: i32, %arg2: memref<128x128xf32, #tpu.memory_space<vmem>>, %arg3: memref<512x128xf32, #tpu.memory_space<vmem>>, %arg4: memref<512x128xf32, #tpu.memory_space<vmem>>, %arg5: memref<128x128xf32, #tpu.memory_space<vmem>>, %arg6: memref<128x1xf32, #tpu.memory_space<vmem>>, %arg7: memref<128x1xf32, #tpu.memory_space<vmem>>, %arg8: memref<128x128xf32, #tpu.memory_space<vmem>>, %arg9: memref<128x128xf32, #tpu.memory_space<vmem>>) attributes {dimension_semantics = [#tpu.dimension_semantics<parallel>, #tpu.dimension_semantics<arbitrary>], iteration_bounds = array<i64: 2, 1>, scalar_prefetch = 0 : i64, scratch_operands = 4 : i64, tpu.core_type = #tpu.core_type<tc>, window_params = [{transform_indices = @transform_0, window_bounds = array<i64: 128, 128>}, {transform_indices = @transform_1, window_bounds = array<i64: 512, 128>}, {transform_indices = @transform_2, window_bounds = array<i64: 512, 128>}, {transform_indices = @transform_3, window_bounds = array<i64: 128, 128>}]} {
    %c0_i32 = arith.constant 0 : i32
    %0 = arith.cmpi eq, %arg1, %c0_i32 : i32
    %1 = arith.extui %0 : i1 to i32
    %c0_i32_0 = arith.constant 0 : i32
    %2 = arith.cmpi ne, %1, %c0_i32_0 : i32
    scf.if %2 {
      %cst_23 = arith.constant 0xFF800000 : f32
      %32 = vector.broadcast %cst_23 : f32 to vector<128x1xf32>
      %c0_24 = arith.constant 0 : index
      %c0_25 = arith.constant 0 : index
      %33 = vector.load %arg6[%c0_24, %c0_25] : memref<128x1xf32, #tpu.memory_space<vmem>>, vector<128x1xf32>
      tpu.vector_store %arg6[%c0_24, %c0_25], %32 {strides = array<i32>} : memref<128x1xf32, #tpu.memory_space<vmem>>, vector<128x1xf32>,
      %cst_26 = arith.constant 0.000000e+00 : f32
      %34 = vector.broadcast %cst_26 : f32 to vector<128x1xf32>
      %c0_27 = arith.constant 0 : index
      %c0_28 = arith.constant 0 : index
      %35 = vector.load %arg7[%c0_27, %c0_28] : memref<128x1xf32, #tpu.memory_space<vmem>>, vector<128x1xf32>
      tpu.vector_store %arg7[%c0_27, %c0_28], %34 {strides = array<i32>} : memref<128x1xf32, #tpu.memory_space<vmem>>, vector<128x1xf32>,
      %cst_29 = arith.constant 0.000000e+00 : f32
      %36 = vector.broadcast %cst_29 : f32 to vector<128x128xf32>
      %c0_30 = arith.constant 0 : index
      %c0_31 = arith.constant 0 : index
      %37 = vector.load %arg8[%c0_30, %c0_31] : memref<128x128xf32, #tpu.memory_space<vmem>>, vector<128x128xf32>
      tpu.vector_store %arg8[%c0_30, %c0_31], %36 {strides = array<i32>} : memref<128x128xf32, #tpu.memory_space<vmem>>, vector<128x128xf32>,
      %c0_32 = arith.constant 0 : index
      %c0_33 = arith.constant 0 : index
      %38 = vector.load %arg2[%c0_32, %c0_33] : memref<128x128xf32, #tpu.memory_space<vmem>>, vector<128x128xf32>
      %cst_34 = arith.constant 0.0883883461 : f32
      %39 = vector.broadcast %cst_34 : f32 to vector<128x128xf32>
      %40 = arith.mulf %38, %39 : vector<128x128xf32>
      %c0_35 = arith.constant 0 : index
      %c0_36 = arith.constant 0 : index
      %41 = vector.load %arg9[%c0_35, %c0_36] : memref<128x128xf32, #tpu.memory_space<vmem>>, vector<128x128xf32>
      tpu.vector_store %arg9[%c0_35, %c0_36], %40 {strides = array<i32>} : memref<128x128xf32, #tpu.memory_space<vmem>>, vector<128x128xf32>,
    } else {
    }
    %c0 = arith.constant 0 : index
    %c0_1 = arith.constant 0 : index
    %3 = vector.load %arg9[%c0, %c0_1] : memref<128x128xf32, #tpu.memory_space<vmem>>, vector<128x128xf32>
    %c0_2 = arith.constant 0 : index
    %c0_3 = arith.constant 0 : index
    %4 = vector.load %arg3[%c0_2, %c0_3] : memref<512x128xf32, #tpu.memory_space<vmem>>, vector<512x128xf32>
    %cst = arith.constant dense<0.000000e+00> : vector<128x512xf32>
    %5 = tpu.matmul %3, %4, %cst {dimension_numbers = #tpu.dot_dimension_numbers<[1], [1], [0], [0], [0, 0, 1, 0], [], []>} : vector<128x128xf32>, vector<512x128xf32>, vector<128x512xf32> -> vector<128x512xf32>
    %c0_4 = arith.constant 0 : index
    %c0_5 = arith.constant 0 : index
    %6 = vector.load %arg6[%c0_4, %c0_5] : memref<128x1xf32, #tpu.memory_space<vmem>>, vector<128x1xf32>
    %cst_6 = arith.constant dense<0xFF800000> : vector<128xf32>
    %7 = vector.multi_reduction <maximumf>, %5, %cst_6 [1] : vector<128x512xf32> to vector<128xf32>
    %8 = vector.shape_cast %7 : vector<128xf32> to vector<128x1xf32>
    %9 = arith.maximumf %6, %8 : vector<128x1xf32>
    %10 = arith.subf %6, %9 : vector<128x1xf32>
    %11 = math.exp %10 : vector<128x1xf32>
    %12 = vector.broadcast %9 : vector<128x1xf32> to vector<128x512xf32>
    %13 = arith.subf %5, %12 : vector<128x512xf32>
    %14 = math.exp %13 : vector<128x512xf32>
    %c0_7 = arith.constant 0 : index
    %c0_8 = arith.constant 0 : index
    %15 = vector.load %arg7[%c0_7, %c0_8] : memref<128x1xf32, #tpu.memory_space<vmem>>, vector<128x1xf32>
    %16 = arith.mulf %11, %15 : vector<128x1xf32>
    %cst_9 = arith.constant dense<0.000000e+00> : vector<128xf32>
    %17 = vector.multi_reduction <add>, %14, %cst_9 [1] : vector<128x512xf32> to vector<128xf32>
    %18 = vector.shape_cast %17 : vector<128xf32> to vector<128x1xf32>
    %19 = arith.addf %16, %18 : vector<128x1xf32>
    %c0_10 = arith.constant 0 : index
    %c0_11 = arith.constant 0 : index
    %20 = vector.load %arg7[%c0_10, %c0_11] : memref<128x1xf32, #tpu.memory_space<vmem>>, vector<128x1xf32>
    tpu.vector_store %arg7[%c0_10, %c0_11], %19 {strides = array<i32>} : memref<128x1xf32, #tpu.memory_space<vmem>>, vector<128x1xf32>,
    %c0_12 = arith.constant 0 : index
    %c0_13 = arith.constant 0 : index
    %21 = vector.load %arg8[%c0_12, %c0_13] : memref<128x128xf32, #tpu.memory_space<vmem>>, vector<128x128xf32>
    %22 = vector.broadcast %11 : vector<128x1xf32> to vector<128x128xf32>
    %23 = arith.mulf %22, %21 : vector<128x128xf32>
    %c0_14 = arith.constant 0 : index
    %c0_15 = arith.constant 0 : index
    %24 = vector.load %arg4[%c0_14, %c0_15] : memref<512x128xf32, #tpu.memory_space<vmem>>, vector<512x128xf32>
    %cst_16 = arith.constant dense<0.000000e+00> : vector<128x128xf32>
    %25 = tpu.matmul %14, %24, %cst_16 {dimension_numbers = #tpu.dot_dimension_numbers<[1], [0], [0], [1], [0, 0, 1, 1], [], []>} : vector<128x512xf32>, vector<512x128xf32>, vector<128x128xf32> -> vector<128x128xf32>
    %26 = arith.addf %23, %25 : vector<128x128xf32>
    %c0_17 = arith.constant 0 : index
    %c0_18 = arith.constant 0 : index
    %27 = vector.load %arg8[%c0_17, %c0_18] : memref<128x128xf32, #tpu.memory_space<vmem>>, vector<128x128xf32>
    tpu.vector_store %arg8[%c0_17, %c0_18], %26 {strides = array<i32>} : memref<128x128xf32, #tpu.memory_space<vmem>>, vector<128x128xf32>,
    %c0_19 = arith.constant 0 : index
    %c0_20 = arith.constant 0 : index
    %28 = vector.load %arg6[%c0_19, %c0_20] : memref<128x1xf32, #tpu.memory_space<vmem>>, vector<128x1xf32>
    tpu.vector_store %arg6[%c0_19, %c0_20], %9 {strides = array<i32>} : memref<128x1xf32, #tpu.memory_space<vmem>>, vector<128x1xf32>,
    %c0_i32_21 = arith.constant 0 : i32
    %29 = arith.cmpi eq, %arg1, %c0_i32_21 : i32
    %30 = arith.extui %29 : i1 to i32
    %c0_i32_22 = arith.constant 0 : i32
    %31 = arith.cmpi ne, %30, %c0_i32_22 : i32
    scf.if %31 {
      %c0_23 = arith.constant 0 : index
      %c0_24 = arith.constant 0 : index
      %32 = vector.load %arg7[%c0_23, %c0_24] : memref<128x1xf32, #tpu.memory_space<vmem>>, vector<128x1xf32>
      %33 = tpu.reciprocal %32 {approx = true} : vector<128x1xf32> -> vector<128x1xf32>
      %c0_25 = arith.constant 0 : index
      %c0_26 = arith.constant 0 : index
      %34 = vector.load %arg8[%c0_25, %c0_26] : memref<128x128xf32, #tpu.memory_space<vmem>>, vector<128x128xf32>
      %35 = vector.broadcast %33 : vector<128x1xf32> to vector<128x128xf32>
      %36 = arith.mulf %34, %35 : vector<128x128xf32>
      %c0_27 = arith.constant 0 : index
      %c0_28 = arith.constant 0 : index
      %37 = vector.load %arg5[%c0_27, %c0_28] : memref<128x128xf32, #tpu.memory_space<vmem>>, vector<128x128xf32>
      tpu.vector_store %arg5[%c0_27, %c0_28], %36 {strides = array<i32>} : memref<128x128xf32, #tpu.memory_space<vmem>>, vector<128x128xf32>,
    } else {
    }
    return
  }
  func.func @transform_0(%arg0: i32, %arg1: i32) -> (i32, i32) {
    %c0_i32 = arith.constant 0 : i32
    %c0_i32_0 = arith.constant 0 : i32
    return %arg0, %c0_i32 : i32, i32
  }
  func.func @transform_1(%arg0: i32, %arg1: i32) -> (i32, i32) {
    %c0_i32 = arith.constant 0 : i32
    %c0_i32_0 = arith.constant 0 : i32
    return %arg1, %c0_i32 : i32, i32
  }
  func.func @transform_2(%arg0: i32, %arg1: i32) -> (i32, i32) {
    %c0_i32 = arith.constant 0 : i32
    %c0_i32_0 = arith.constant 0 : i32
    return %arg1, %c0_i32 : i32, i32
  }
  func.func @transform_3(%arg0: i32, %arg1: i32) -> (i32, i32) {
    %c0_i32 = arith.constant 0 : i32
    %c0_i32_0 = arith.constant 0 : i32
    return %arg0, %c0_i32 : i32, i32
  }
}

</mosaic_0001>

<llo_original>
// kernel: tpu_custom_call.1
$region0: #{tpu_custom_call.1}
  #allocation0 [shape = 'u32[]', space=smem, size = 0x4, offset = 0x4, fixed_abs, tag = 'smem constant byte address 0x4 - core index']
  #allocation1 [shape = 'u32[144,128]{1,0:T(1,128)}', space=vmem, size = 0x12000, scoped, tag = 'internal scratch']
  #allocation2 [shape = 'f32[128,1]{1,0:T(8,128)}', space=vmem, size = 0x10000, scoped, tag = 'scratch operand']
  #allocation3 [shape = 'f32[128,1]{1,0:T(8,128)}', space=vmem, size = 0x10000, scoped, tag = 'scratch operand']
  #allocation4 [shape = 'f32[128,128]{1,0:T(8,128)}', space=vmem, size = 0x10000, scoped, tag = 'scratch operand']
  #allocation5 [shape = 'f32[128,128]{1,0:T(8,128)}', space=vmem, size = 0x10000, scoped, tag = 'scratch operand']
  %s0 = inlined_call_operand.hbm [shape: f32[256,128], index: 0, kind: input, shape index: {}]
  %s1 = inlined_call_operand.hbm [shape: f32[512,128], index: 1, kind: input, shape index: {}]
  %s2 = inlined_call_operand.hbm [shape: f32[512,128], index: 2, kind: input, shape index: {}]
  %s3 = inlined_call_operand.hbm [shape: f32[256,128], index: 3, kind: output, shape index: {}]
  %s4 = sld [smem:[#allocation0]]
  $region65: #{tpu_custom_call.1} parent=0
    _
  %s6 = ssub.s32 1, %s4
  %s7 = scalar_select 0, %s6, %s4
  $region1: #{tpu_custom_call.1} parent=0
    #allocation6 [shape = 'u8[131072]{0}', space=vmem, size = 0x20000, scoped, tag = 'input window, operand 0']
    #allocation7 [shape = 's32[2]{0}', space=sflag, size = 0x8, scoped, tag = 'scoped memory for tpu_custom_call.1']
    #allocation8 [shape = 's32[2]{0}', space=sflag, size = 0x8, scoped, tag = 'scoped memory for tpu_custom_call.1']
    #allocation9 [shape = 'u8[262144]{0}', space=vmem, size = 0x40000, scoped, tag = 'input window, operand 1, single buffered']
    #allocation10 [shape = 's32[1]{0}', space=sflag, size = 0x4, scoped, tag = 'scoped memory for tpu_custom_call.1']
    #allocation11 [shape = 'u8[262144]{0}', space=vmem, size = 0x40000, scoped, tag = 'input window, operand 2, single buffered']
    #allocation12 [shape = 'u8[131072]{0}', space=vmem, size = 0x20000, scoped, tag = 'output window, operand 0']
    %8 = vsyncpa [#allocation7], 0
    %s9 = scalar_lea.sflag [#allocation7], 1
    %10 = vsyncpa %s9, 0
    %11 = vsyncpa [#allocation10], 0
    %12 = vsyncpa [#allocation8], 0
    %s13 = scalar_lea.sflag [#allocation8], 1
    %14 = vsyncpa %s13, 0
    loop: start=0, step=1, limit=4
    $region2: #{tpu_custom_call.1} parent=1 // loop_pre_header
      _
    $region3: #{tpu_custom_call.1} parent=1 // loop_header
      %s16 = sphi 0, %s20
      %p17 = scmp.ge.s32.totalorder %s16, 4
      %s23 = sphi 0, %s35
      %s24 = sphi 0, %s31
      %s25 = sphi 0, %s23
      %s26 = sphi 0, %s24
      %s27 = sphi 0, %s25
      %s28 = sphi 0, %s26
      %s38 = sphi 0, %s40
      %s41 = sphi 0, %s38
      %s42 = sphi 0, %s41
      %s58 = sphi 0, %s42
      %s64 = sphi 0, %s66
      %s67 = sphi 0, %s64
      %s68 = sphi 0, %s67
      %s84 = sphi 0, %s68
      %s90 = sphi 0, %s92
      %s93 = sphi 0, %s90
      %s94 = sphi 0, %s93
      %s110 = sphi 0, %s94
      %s116 = sphi 0, %s118
      %s119 = sphi 0, %s116
      %s120 = sphi 0, %s119
      %s136 = sphi 0, %s120
    $region4: #{tpu_custom_call.1} parent=1 // loop_header_branch
      %19 = sbr.rel (%p17) target = $region8
    $region5: #{tpu_custom_call.1} parent=1 // loop_body
      %s21 = ssub.s32 %s16, 1
      %s22 = ssub.s32 %s16, 2
      %s29 = sadd.s32 1, %s24
      %p30 = scmp.ge.s32.totalorder %s29, 1
      %s31 = scalar_select %p30, 0, %s29
      %s32 = sadd.s32 1, %s23
      %s33 = scalar_select %p30, %s32, %s23
      %p34 = scmp.ge.s32.totalorder %s33, 2
      %s35 = scalar_select %p34, 0, %s33
      %s36 = ssub.s32 %s23, %s35
      %p37 = scmp.eq.s32.totalorder %s36, 0
      %s39 = sadd.s32 %s38, 1
      %s40 = scalar_select %p37, %s38, %s39
      %p43 = pneg %p37
      %p44 = scmp.eq.s32.totalorder %s16, 1
      %p45 = por %p43, %p44
      %p46 = scmp.ne.s32.totalorder %s38, %s41
      %p47 = scmp.eq.s32.totalorder %s16, 0
      %p48 = por %p46, %p47
      %p49 = scmp.ne.s32.totalorder %s38, %s41
      %p50 = scmp.eq.s32.totalorder %s21, 1
      %p51 = por %p49, %p50
      %p52 = scmp.ne.s32.totalorder %s41, %s42
      %p53 = scmp.eq.s32.totalorder %s21, 0
      %p54 = por %p52, %p53
      %p55 = scmp.ne.s32.totalorder %s41, %s42
      %p56 = scmp.eq.s32.totalorder %s22, 1
      %p57 = por %p55, %p56
      %p59 = scmp.ne.s32.totalorder %s42, %s58
      %p60 = scmp.eq.s32.totalorder %s22, 0
      %p61 = por %p59, %p60
      %s62 = ssub.s32 %s24, %s31
      %p63 = scmp.eq.s32.totalorder %s62, 0
      %s65 = sadd.s32 %s64, 1
      %s66 = scalar_select %p63, %s64, %s65
      %p69 = pneg %p63
      %p70 = scmp.eq.s32.totalorder %s16, 1
      %p71 = por %p69, %p70
      %p72 = scmp.ne.s32.totalorder %s64, %s67
      %p73 = scmp.eq.s32.totalorder %s16, 0
      %p74 = por %p72, %p73
      %p75 = scmp.ne.s32.totalorder %s64, %s67
      %p76 = scmp.eq.s32.totalorder %s21, 1
      %p77 = por %p75, %p76
      %p78 = scmp.ne.s32.totalorder %s67, %s68
      %p79 = scmp.eq.s32.totalorder %s21, 0
      %p80 = por %p78, %p79
      %p81 = scmp.ne.s32.totalorder %s67, %s68
      %p82 = scmp.eq.s32.totalorder %s22, 1
      %p83 = por %p81, %p82
      %p85 = scmp.ne.s32.totalorder %s68, %s84
      %p86 = scmp.eq.s32.totalorder %s22, 0
      %p87 = por %p85, %p86
      %s88 = ssub.s32 %s24, %s31
      %p89 = scmp.eq.s32.totalorder %s88, 0
      %s91 = sadd.s32 %s90, 1
      %s92 = scalar_select %p89, %s90, %s91
      %p95 = pneg %p89
      %p96 = scmp.eq.s32.totalorder %s16, 1
      %p97 = por %p95, %p96
      %p98 = scmp.ne.s32.totalorder %s90, %s93
      %p99 = scmp.eq.s32.totalorder %s16, 0
      %p100 = por %p98, %p99
      %p101 = scmp.ne.s32.totalorder %s90, %s93
      %p102 = scmp.eq.s32.totalorder %s21, 1
      %p103 = por %p101, %p102
      %p104 = scmp.ne.s32.totalorder %s93, %s94
      %p105 = scmp.eq.s32.totalorder %s21, 0
      %p106 = por %p104, %p105
      %p107 = scmp.ne.s32.totalorder %s93, %s94
      %p108 = scmp.eq.s32.totalorder %s22, 1
      %p109 = por %p107, %p108
      %p111 = scmp.ne.s32.totalorder %s94, %s110
      %p112 = scmp.eq.s32.totalorder %s22, 0
      %p113 = por %p111, %p112
      %s114 = ssub.s32 %s23, %s35
      %p115 = scmp.eq.s32.totalorder %s114, 0
      %s117 = sadd.s32 %s116, 1
      %s118 = scalar_select %p115, %s116, %s117
      %p121 = pneg %p115
      %p122 = scmp.eq.s32.totalorder %s16, 1
      %p123 = por %p121, %p122
      %p124 = scmp.ne.s32.totalorder %s116, %s119
      %p125 = scmp.eq.s32.totalorder %s16, 0
      %p126 = por %p124, %p125
      %p127 = scmp.ne.s32.totalorder %s116, %s119
      %p128 = scmp.eq.s32.totalorder %s21, 1
      %p129 = por %p127, %p128
      %p130 = scmp.ne.s32.totalorder %s119, %s120
      %p131 = scmp.eq.s32.totalorder %s21, 0
      %p132 = por %p130, %p131
      %p133 = scmp.ne.s32.totalorder %s119, %s120
      %p134 = scmp.eq.s32.totalorder %s22, 1
      %p135 = por %p133, %p134
      %p137 = scmp.ne.s32.totalorder %s120, %s136
      %p138 = scmp.eq.s32.totalorder %s22, 0
      %p139 = por %p137, %p138
      %p140 = scmp.le.s32.totalorder 1, %s16
      %p141 = scmp.lt.s32.totalorder %s16, 3
      %p142 = pnand %p140, %p141
      %p143 = pneg %p142
      // Predicated region
      $region9: #{tpu_custom_call.1} parent=5 // pred_check
        _
      $region10: #{tpu_custom_call.1} parent=5 // pred_check_branch
        %145 = sbr.rel (%p142) target = $region12
      $region11: #{tpu_custom_call.1} parent=5 // pred_region
        %s146 = ssub.s32 %s16, 1
        // Predicated region
        $region13: #{tpu_custom_call.1} parent=11 // pred_check
          %p147 = pneg %p80
        $region14: #{tpu_custom_call.1} parent=11 // pred_check_branch
          %149 = sbr.rel (%p147) target = $region16
        $region15: #{tpu_custom_call.1} parent=11 // pred_region
          %s150 = smul.u32 64, %s26
          %s152 = ssub.s32 8192, 8192
          %153 = vsyncadd [#allocation10], %s152
          %s154 = smul.addr %s150, 128
          %s155 = scalar_lea.hbm %s1, %s154
          %s156 = sshll.u32 [#allocation9], 4
          %s157 = int_to_ptr.vmem [resolvable:$true] %s156
          %162 = dma.hbm_to_vmem [thread:$0]  %s155, 8192, %s157, [#allocation10], 128, 128, 8
        $region16: #{tpu_custom_call.1} parent=11 // pred_fallthru
          _
        // Predicated region
        $region17: #{tpu_custom_call.1} parent=11 // pred_check
          %p163 = pneg %p106
        $region18: #{tpu_custom_call.1} parent=11 // pred_check_branch
          %165 = sbr.rel (%p163) target = $region20
        $region19: #{tpu_custom_call.1} parent=11 // pred_region
          %s166 = smul.u32 64, %s26
          %s168 = ssub.s32 8192, 8192
          %169 = vsyncadd [#allocation10], %s168
          %s170 = smul.addr %s166, 128
          %s171 = scalar_lea.hbm %s2, %s170
          %s172 = sshll.u32 [#allocation11], 4
          %s173 = int_to_ptr.vmem [resolvable:$true] %s172
          %178 = dma.hbm_to_vmem [thread:$0]  %s171, 8192, %s173, [#allocation10], 128, 128, 8
        $region20: #{tpu_custom_call.1} parent=11 // pred_fallthru
          _
      $region12: #{tpu_custom_call.1} parent=5 // pred_fallthru
        _
      %p179 = scmp.lt.s32.totalorder %s16, 2
      // Predicated region
      $region21: #{tpu_custom_call.1} parent=5 // pred_check
        %p180 = pneg %p179
      $region22: #{tpu_custom_call.1} parent=5 // pred_check_branch
        %182 = sbr.rel (%p180) target = $region24
      $region23: #{tpu_custom_call.1} parent=5 // pred_region
        // Predicated region
        $region25: #{tpu_custom_call.1} parent=23 // pred_check
          %p183 = pneg %p48
        $region26: #{tpu_custom_call.1} parent=23 // pred_check_branch
          %185 = sbr.rel (%p183) target = $region28
        $region27: #{tpu_custom_call.1} parent=23 // pred_region
          %s186 = sand.u32 %s38, 1
          %s187 = scalar_lea.sflag [#allocation7], %s186
          %s188 = sand.u32 %s38, 1
          %s189 = smul.addr %s188, 128
          %s190 = scalar_lea.vmem [#allocation6], %s189
          %s191 = smul.u32 16, %s23
          %s193 = ssub.s32 2048, 2048
          %194 = vsyncadd %s187, %s193
          %s195 = smul.addr %s191, 128
          %s196 = scalar_lea.hbm %s0, %s195
          %s197 = sshll.u32 %s190, 4
          %s198 = int_to_ptr.vmem [resolvable:$true] %s197
          %203 = dma.hbm_to_vmem [thread:$0]  %s196, 2048, %s198, %s187, 128, 128, 8
        $region28: #{tpu_custom_call.1} parent=23 // pred_fallthru
          _
      $region24: #{tpu_custom_call.1} parent=5 // pred_fallthru
        _
      %p204 = scmp.le.s32.totalorder 1, %s16
      %p205 = scmp.lt.s32.totalorder %s16, 3
      %p206 = pnand %p204, %p205
      %p207 = pneg %p206
      // Predicated region
      $region29: #{tpu_custom_call.1} parent=5 // pred_check
        _
      $region30: #{tpu_custom_call.1} parent=5 // pred_check_branch
        %209 = sbr.rel (%p206) target = $region32
      $region31: #{tpu_custom_call.1} parent=5 // pred_region
        %s210 = ssub.s32 %s16, 1
        %s211 = sand.u32 %s41, 1
        %s212 = scalar_lea.sflag [#allocation7], %s211
        %s213 = sand.u32 %s41, 1
        %s214 = smul.addr %s213, 128
        %s215 = scalar_lea.vmem [#allocation6], %s214
        // Predicated region
        $region33: #{tpu_custom_call.1} parent=31 // pred_check
          %p216 = pneg %p54
        $region34: #{tpu_custom_call.1} parent=31 // pred_check_branch
          %218 = sbr.rel (%p216) target = $region36
        $region35: #{tpu_custom_call.1} parent=31 // pred_region
          %219 = dma.done %s212, 2048
        $region36: #{tpu_custom_call.1} parent=31 // pred_fallthru
          _
        // Predicated region
        $region37: #{tpu_custom_call.1} parent=31 // pred_check
          %p220 = pneg %p80
        $region38: #{tpu_custom_call.1} parent=31 // pred_check_branch
          %222 = sbr.rel (%p220) target = $region40
        $region39: #{tpu_custom_call.1} parent=31 // pred_region
          %223 = dma.done [#allocation10], 8192
        $region40: #{tpu_custom_call.1} parent=31 // pred_fallthru
          _
        // Predicated region
        $region41: #{tpu_custom_call.1} parent=31 // pred_check
          %p224 = pneg %p106
        $region42: #{tpu_custom_call.1} parent=31 // pred_check_branch
          %226 = sbr.rel (%p224) target = $region44
        $region43: #{tpu_custom_call.1} parent=31 // pred_region
          %227 = dma.done [#allocation10], 8192
        $region44: #{tpu_custom_call.1} parent=31 // pred_fallthru
          _
        %s228 = sand.u32 %s41, 1
        %s229 = scalar_lea.sflag [#allocation7], %s228
        %s230 = sand.u32 %s41, 1
        %s231 = smul.addr %s230, 128
        %s232 = scalar_lea.vmem [#allocation6], %s231
        %p233 = pneg %p54
        %p234 = pneg %p51
        %p235 = pneg %p80
        %p236 = pneg %p77
        %p237 = pneg %p106
        %p238 = pneg %p103
        %p239 = pneg %p132
        %p240 = pneg %p129
        %s241 = sand.u32 %s119, 1
        %s242 = scalar_lea.sflag [#allocation8], %s241
        %s243 = sand.u32 %s119, 1
        %s244 = smul.addr %s243, 128
        %s245 = scalar_lea.vmem [#allocation12], %s244
        %s246 = smul.u32 16, %s25
        %s247 = smul.u32 64, %s26
        %s248 = smul.u32 64, %s26
        %s249 = smul.u32 16, %s25
        %p250 = scmp.eq.s32.totalorder %s26, 0
        // Predicated region
        $region45: #{tpu_custom_call.1} parent=31 // pred_check
          %p251 = pneg %p250
        $region46: #{tpu_custom_call.1} parent=31 // pred_check_branch
          %253 = sbr.rel (%p251) target = $region48
        $region47: #{tpu_custom_call.1} parent=31 // pred_region
          %vm254 = vcmask 7168
          %255 = vst.msk [vmem:[#allocation2] sm:$0xff] %vm254, -inf
          %256 = vst.msk [vmem:[#allocation2 + $0x8] sm:$0xff] %vm254, -inf
          %257 = vst.msk [vmem:[#allocation2 + $0x10] sm:$0xff] %vm254, -inf
          %258 = vst.msk [vmem:[#allocation2 + $0x18] sm:$0xff] %vm254, -inf
          %259 = vst.msk [vmem:[#allocation2 + $0x20] sm:$0xff] %vm254, -inf
          %260 = vst.msk [vmem:[#allocation2 + $0x28] sm:$0xff] %vm254, -inf
          %261 = vst.msk [vmem:[#allocation2 + $0x30] sm:$0xff] %vm254, -inf
          %262 = vst.msk [vmem:[#allocation2 + $0x38] sm:$0xff] %vm254, -inf
          %263 = vst.msk [vmem:[#allocation2 + $0x40] sm:$0xff] %vm254, -inf
          %264 = vst.msk [vmem:[#allocation2 + $0x48] sm:$0xff] %vm254, -inf
          %265 = vst.msk [vmem:[#allocation2 + $0x50] sm:$0xff] %vm254, -inf
          %266 = vst.msk [vmem:[#allocation2 + $0x58] sm:$0xff] %vm254, -inf
          %267 = vst.msk [vmem:[#allocation2 + $0x60] sm:$0xff] %vm254, -inf
          %268 = vst.msk [vmem:[#allocation2 + $0x68] sm:$0xff] %vm254, -inf
          %269 = vst.msk [vmem:[#allocation2 + $0x70] sm:$0xff] %vm254, -inf
          %270 = vst.msk [vmem:[#allocation2 + $0x78] sm:$0xff] %vm254, -inf
          %271 = vst.msk [vmem:[#allocation3] sm:$0xff] %vm254, 0.0
          %272 = vst.msk [vmem:[#allocation3 + $0x8] sm:$0xff] %vm254, 0.0
          %273 = vst.msk [vmem:[#allocation3 + $0x10] sm:$0xff] %vm254, 0.0
          %274 = vst.msk [vmem:[#allocation3 + $0x18] sm:$0xff] %vm254, 0.0
          %275 = vst.msk [vmem:[#allocation3 + $0x20] sm:$0xff] %vm254, 0.0
          %276 = vst.msk [vmem:[#allocation3 + $0x28] sm:$0xff] %vm254, 0.0
          %277 = vst.msk [vmem:[#allocation3 + $0x30] sm:$0xff] %vm254, 0.0
          %278 = vst.msk [vmem:[#allocation3 + $0x38] sm:$0xff] %vm254, 0.0
          %279 = vst.msk [vmem:[#allocation3 + $0x40] sm:$0xff] %vm254, 0.0
          %280 = vst.msk [vmem:[#allocation3 + $0x48] sm:$0xff] %vm254, 0.0
          %281 = vst.msk [vmem:[#allocation3 + $0x50] sm:$0xff] %vm254, 0.0
          %282 = vst.msk [vmem:[#allocation3 + $0x58] sm:$0xff] %vm254, 0.0
          %283 = vst.msk [vmem:[#allocation3 + $0x60] sm:$0xff] %vm254, 0.0
          %284 = vst.msk [vmem:[#allocation3 + $0x68] sm:$0xff] %vm254, 0.0
          %285 = vst.msk [vmem:[#allocation3 + $0x70] sm:$0xff] %vm254, 0.0
          %286 = vst.msk [vmem:[#allocation3 + $0x78] sm:$0xff] %vm254, 0.0
          %287 = vst [vmem:[#allocation4] sm:$0xff] 0.0
          %288 = vst [vmem:[#allocation4 + $0x8] sm:$0xff] 0.0
          %289 = vst [vmem:[#allocation4 + $0x10] sm:$0xff] 0.0
          %290 = vst [vmem:[#allocation4 + $0x18] sm:$0xff] 0.0
          %291 = vst [vmem:[#allocation4 + $0x20] sm:$0xff] 0.0
          %292 = vst [vmem:[#allocation4 + $0x28] sm:$0xff] 0.0
          %293 = vst [vmem:[#allocation4 + $0x30] sm:$0xff] 0.0
          %294 = vst [vmem:[#allocation4 + $0x38] sm:$0xff] 0.0
          %295 = vst [vmem:[#allocation4 + $0x40] sm:$0xff] 0.0
          %296 = vst [vmem:[#allocation4 + $0x48] sm:$0xff] 0.0
          %297 = vst [vmem:[#allocation4 + $0x50] sm:$0xff] 0.0
          %298 = vst [vmem:[#allocation4 + $0x58] sm:$0xff] 0.0
          %299 = vst [vmem:[#allocation4 + $0x60] sm:$0xff] 0.0
          %300 = vst [vmem:[#allocation4 + $0x68] sm:$0xff] 0.0
          %301 = vst [vmem:[#allocation4 + $0x70] sm:$0xff] 0.0
          %302 = vst [vmem:[#allocation4 + $0x78] sm:$0xff] 0.0
          %v303 = vld [vmem:[%s215] sm:$0xff]
          %v304 = vld [vmem:[%s215 + $0x8] sm:$0xff]
          %v305 = vld [vmem:[%s215 + $0x10] sm:$0xff]
          %v306 = vld [vmem:[%s215 + $0x18] sm:$0xff]
          %v307 = vld [vmem:[%s215 + $0x20] sm:$0xff]
          %v308 = vld [vmem:[%s215 + $0x28] sm:$0xff]
          %v309 = vld [vmem:[%s215 + $0x30] sm:$0xff]
          %v310 = vld [vmem:[%s215 + $0x38] sm:$0xff]
          %v311 = vld [vmem:[%s215 + $0x40] sm:$0xff]
          %v312 = vld [vmem:[%s215 + $0x48] sm:$0xff]
          %v313 = vld [vmem:[%s215 + $0x50] sm:$0xff]
          %v314 = vld [vmem:[%s215 + $0x58] sm:$0xff]
          %v315 = vld [vmem:[%s215 + $0x60] sm:$0xff]
          %v316 = vld [vmem:[%s215 + $0x68] sm:$0xff]
          %v317 = vld [vmem:[%s215 + $0x70] sm:$0xff]
          %v318 = vld [vmem:[%s215 + $0x78] sm:$0xff]
          %v319 = vmul.f32 %v303, 0.088388346
          %v320 = vmul.f32 %v304, 0.088388346
          %v321 = vmul.f32 %v305, 0.088388346
          %v322 = vmul.f32 %v306, 0.088388346
          %v323 = vmul.f32 %v307, 0.088388346
          %v324 = vmul.f32 %v308, 0.088388346
          %v325 = vmul.f32 %v309, 0.088388346
          %v326 = vmul.f32 %v310, 0.088388346
          %v327 = vmul.f32 %v311, 0.088388346
          %v328 = vmul.f32 %v312, 0.088388346
          %v329 = vmul.f32 %v313, 0.088388346
          %v330 = vmul.f32 %v314, 0.088388346
          %v331 = vmul.f32 %v315, 0.088388346
          %v332 = vmul.f32 %v316, 0.088388346
          %v333 = vmul.f32 %v317, 0.088388346
          %v334 = vmul.f32 %v318, 0.088388346
          %335 = vst [vmem:[#allocation5] sm:$0xff] %v319
          %336 = vst [vmem:[#allocation5 + $0x8] sm:$0xff] %v320
          %337 = vst [vmem:[#allocation5 + $0x10] sm:$0xff] %v321
          %338 = vst [vmem:[#allocation5 + $0x18] sm:$0xff] %v322
          %339 = vst [vmem:[#allocation5 + $0x20] sm:$0xff] %v323
          %340 = vst [vmem:[#allocation5 + $0x28] sm:$0xff] %v324
          %341 = vst [vmem:[#allocation5 + $0x30] sm:$0xff] %v325
          %342 = vst [vmem:[#allocation5 + $0x38] sm:$0xff] %v326
          %343 = vst [vmem:[#allocation5 + $0x40] sm:$0xff] %v327
          %344 = vst [vmem:[#allocation5 + $0x48] sm:$0xff] %v328
          %345 = vst [vmem:[#allocation5 + $0x50] sm:$0xff] %v329
          %346 = vst [vmem:[#allocation5 + $0x58] sm:$0xff] %v330
          %347 = vst [vmem:[#allocation5 + $0x60] sm:$0xff] %v331
          %348 = vst [vmem:[#allocation5 + $0x68] sm:$0xff] %v332
          %349 = vst [vmem:[#allocation5 + $0x70] sm:$0xff] %v333
          %350 = vst [vmem:[#allocation5 + $0x78] sm:$0xff] %v334
        $region48: #{tpu_custom_call.1} parent=31 // pred_fallthru
          _
        %v351 = vld [vmem:[#allocation5] sm:$0xff]
        %v352 = vld [vmem:[#allocation5 + $0x8] sm:$0xff]
        %v353 = vld [vmem:[#allocation5 + $0x10] sm:$0xff]
        %v354 = vld [vmem:[#allocation5 + $0x18] sm:$0xff]
        %v355 = vld [vmem:[#allocation5 + $0x20] sm:$0xff]
        %v356 = vld [vmem:[#allocation5 + $0x28] sm:$0xff]
        %v357 = vld [vmem:[#allocation5 + $0x30] sm:$0xff]
        %v358 = vld [vmem:[#allocation5 + $0x38] sm:$0xff]
        %v359 = vld [vmem:[#allocation5 + $0x40] sm:$0xff]
        %v360 = vld [vmem:[#allocation5 + $0x48] sm:$0xff]
        %v361 = vld [vmem:[#allocation5 + $0x50] sm:$0xff]
        %v362 = vld [vmem:[#allocation5 + $0x58] sm:$0xff]
        %v363 = vld [vmem:[#allocation5 + $0x60] sm:$0xff]
        %v364 = vld [vmem:[#allocation5 + $0x68] sm:$0xff]
        %v365 = vld [vmem:[#allocation5 + $0x70] sm:$0xff]
        %v366 = vld [vmem:[#allocation5 + $0x78] sm:$0xff]
        %v367 = vld [vmem:[#allocation9] sm:$0xff]
        %v368 = vld [vmem:[#allocation9 + $0x8] sm:$0xff]
        %v369 = vld [vmem:[#allocation9 + $0x10] sm:$0xff]
        %v370 = vld [vmem:[#allocation9 + $0x18] sm:$0xff]
        %v371 = vld [vmem:[#allocation9 + $0x20] sm:$0xff]
        %v372 = vld [vmem:[#allocation9 + $0x28] sm:$0xff]
        %v373 = vld [vmem:[#allocation9 + $0x30] sm:$0xff]
        %v374 = vld [vmem:[#allocation9 + $0x38] sm:$0xff]
        %v375 = vld [vmem:[#allocation9 + $0x40] sm:$0xff]
        %v376 = vld [vmem:[#allocation9 + $0x48] sm:$0xff]
        %v377 = vld [vmem:[#allocation9 + $0x50] sm:$0xff]
        %v378 = vld [vmem:[#allocation9 + $0x58] sm:$0xff]
        %v379 = vld [vmem:[#allocation9 + $0x60] sm:$0xff]
        %v380 = vld [vmem:[#allocation9 + $0x68] sm:$0xff]
        %v381 = vld [vmem:[#allocation9 + $0x70] sm:$0xff]
        %v382 = vld [vmem:[#allocation9 + $0x78] sm:$0xff]
        %v383 = vld [vmem:[#allocation9 + $0x80] sm:$0xff]
        %v384 = vld [vmem:[#allocation9 + $0x88] sm:$0xff]
        %v385 = vld [vmem:[#allocation9 + $0x90] sm:$0xff]
        %v386 = vld [vmem:[#allocation9 + $0x98] sm:$0xff]
        %v387 = vld [vmem:[#allocation9 + $0xa0] sm:$0xff]
        %v388 = vld [vmem:[#allocation9 + $0xa8] sm:$0xff]
        %v389 = vld [vmem:[#allocation9 + $0xb0] sm:$0xff]
        %v390 = vld [vmem:[#allocation9 + $0xb8] sm:$0xff]
        %v391 = vld [vmem:[#allocation9 + $0xc0] sm:$0xff]
        %v392 = vld [vmem:[#allocation9 + $0xc8] sm:$0xff]
        %v393 = vld [vmem:[#allocation9 + $0xd0] sm:$0xff]
        %v394 = vld [vmem:[#allocation9 + $0xd8] sm:$0xff]
        %v395 = vld [vmem:[#allocation9 + $0xe0] sm:$0xff]
        %v396 = vld [vmem:[#allocation9 + $0xe8] sm:$0xff]
        %v397 = vld [vmem:[#allocation9 + $0xf0] sm:$0xff]
        %v398 = vld [vmem:[#allocation9 + $0xf8] sm:$0xff]
        %v399 = vld [vmem:[#allocation9 + $0x100] sm:$0xff]
        %v400 = vld [vmem:[#allocation9 + $0x108] sm:$0xff]
        %v401 = vld [vmem:[#allocation9 + $0x110] sm:$0xff]
        %v402 = vld [vmem:[#allocation9 + $0x118] sm:$0xff]
        %v403 = vld [vmem:[#allocation9 + $0x120] sm:$0xff]
        %v404 = vld [vmem:[#allocation9 + $0x128] sm:$0xff]
        %v405 = vld [vmem:[#allocation9 + $0x130] sm:$0xff]
        %v406 = vld [vmem:[#allocation9 + $0x138] sm:$0xff]
        %v407 = vld [vmem:[#allocation9 + $0x140] sm:$0xff]
        %v408 = vld [vmem:[#allocation9 + $0x148] sm:$0xff]
        %v409 = vld [vmem:[#allocation9 + $0x150] sm:$0xff]
        %v410 = vld [vmem:[#allocation9 + $0x158] sm:$0xff]
        %v411 = vld [vmem:[#allocation9 + $0x160] sm:$0xff]
        %v412 = vld [vmem:[#allocation9 + $0x168] sm:$0xff]
        %v413 = vld [vmem:[#allocation9 + $0x170] sm:$0xff]
        %v414 = vld [vmem:[#allocation9 + $0x178] sm:$0xff]
        %v415 = vld [vmem:[#allocation9 + $0x180] sm:$0xff]
        %v416 = vld [vmem:[#allocation9 + $0x188] sm:$0xff]
        %v417 = vld [vmem:[#allocation9 + $0x190] sm:$0xff]
        %v418 = vld [vmem:[#allocation9 + $0x198] sm:$0xff]
        %v419 = vld [vmem:[#allocation9 + $0x1a0] sm:$0xff]
        %v420 = vld [vmem:[#allocation9 + $0x1a8] sm:$0xff]
        %v421 = vld [vmem:[#allocation9 + $0x1b0] sm:$0xff]
        %v422 = vld [vmem:[#allocation9 + $0x1b8] sm:$0xff]
        %v423 = vld [vmem:[#allocation9 + $0x1c0] sm:$0xff]
        %v424 = vld [vmem:[#allocation9 + $0x1c8] sm:$0xff]
        %v425 = vld [vmem:[#allocation9 + $0x1d0] sm:$0xff]
        %v426 = vld [vmem:[#allocation9 + $0x1d8] sm:$0xff]
        %v427 = vld [vmem:[#allocation9 + $0x1e0] sm:$0xff]
        %v428 = vld [vmem:[#allocation9 + $0x1e8] sm:$0xff]
        %v429 = vld [vmem:[#allocation9 + $0x1f0] sm:$0xff]
        %v430 = vld [vmem:[#allocation9 + $0x1f8] sm:$0xff]
        %431 = vmatprep.subr.mxu0 0.0
        %432 = vmatpush1.xpose.msra.mxu0 %v367
        %433 = vmatprep.subr.mxu0 0.0
        %434 = vmatpush1.xpose.msra.mxu0 %v368
        %435 = vmatprep.subr.mxu0 0.0
        %436 = vmatpush1.xpose.msra.mxu0 %v369
        %437 = vmatprep.subr.mxu0 0.0
        %438 = vmatpush1.xpose.msra.mxu0 %v370
        %439 = vmatprep.subr.mxu0 0.0
        %440 = vmatpush1.xpose.msra.mxu0 %v371
        %441 = vmatprep.subr.mxu0 0.0
        %442 = vmatpush1.xpose.msra.mxu0 %v372
        %443 = vmatprep.subr.mxu0 0.0
        %444 = vmatpush1.xpose.msra.mxu0 %v373
        %445 = vmatprep.subr.mxu0 0.0
        %446 = vmatpush1.xpose.msra.mxu0 %v374
        %447 = vmatprep.subr.mxu0 0.0
        %448 = vmatpush1.xpose.msra.mxu0 %v375
        %449 = vmatprep.subr.mxu0 0.0
        %450 = vmatpush1.xpose.msra.mxu0 %v376
        %451 = vmatprep.subr.mxu0 0.0
        %452 = vmatpush1.xpose.msra.mxu0 %v377
        %453 = vmatprep.subr.mxu0 0.0
        %454 = vmatpush1.xpose.msra.mxu0 %v378
        %455 = vmatprep.subr.mxu0 0.0
        %456 = vmatpush1.xpose.msra.mxu0 %v379
        %457 = vmatprep.subr.mxu0 0.0
        %458 = vmatpush1.xpose.msra.mxu0 %v380
        %459 = vmatprep.subr.mxu0 0.0
        %460 = vmatpush1.xpose.msra.mxu0 %v381
        %461 = vmatprep.subr.mxu0 0.0
        %462 = vmatpush1.xpose.msra.mxu0 %v382
        %463 = vmatprep.subr.mxu0 0.0
        %464 = vmatpush1.xpose.msra.mxu0 %v383
        %465 = vmatprep.subr.mxu0 0.0
        %466 = vmatpush1.xpose.msra.mxu0 %v384
        %467 = vmatprep.subr.mxu0 0.0
        %468 = vmatpush1.xpose.msra.mxu0 %v385
        %469 = vmatprep.subr.mxu0 0.0
        %470 = vmatpush1.xpose.msra.mxu0 %v386
        %471 = vmatprep.subr.mxu0 0.0
        %472 = vmatpush1.xpose.msra.mxu0 %v387
        %473 = vmatprep.subr.mxu0 0.0
        %474 = vmatpush1.xpose.msra.mxu0 %v388
        %475 = vmatprep.subr.mxu0 0.0
        %476 = vmatpush1.xpose.msra.mxu0 %v389
        %477 = vmatprep.subr.mxu0 0.0
        %478 = vmatpush1.xpose.msra.mxu0 %v390
        %479 = vmatprep.subr.mxu0 0.0
        %480 = vmatpush1.xpose.msra.mxu0 %v391
        %481 = vmatprep.subr.mxu0 0.0
        %482 = vmatpush1.xpose.msra.mxu0 %v392
        %483 = vmatprep.subr.mxu0 0.0
        %484 = vmatpush1.xpose.msra.mxu0 %v393
        %485 = vmatprep.subr.mxu0 0.0
        %486 = vmatpush1.xpose.msra.mxu0 %v394
        %487 = vmatprep.subr.mxu0 0.0
        %488 = vmatpush1.xpose.msra.mxu0 %v395
        %489 = vmatprep.subr.mxu0 0.0
        %490 = vmatpush1.xpose.msra.mxu0 %v396
        %491 = vmatprep.subr.mxu0 0.0
        %492 = vmatpush1.xpose.msra.mxu0 %v397
        %493 = vmatprep.subr.mxu0 0.0
        %494 = vmatpush1.xpose.msra.mxu0 %v398
        %495 = vmatprep.mubr.f32.mxu0 0.0
        %496 = vmatmul.mubr.f32.gmra.mrb[0].mxu0 %v351
        %v497 = vpop.f32.mrb[0].mxu0
        %v498 = vadd.f32 0.0, %v497
        %v499 = vpop.f32.mrb[0].mxu0
        %v500 = vadd.f32 0.0, %v499
        %501 = vmatprep.mubr.f32.mxu0 0.0
        %502 = vmatmul.mubr.f32.gmra.mrb[0].mxu0 %v352
        %v503 = vpop.f32.mrb[0].mxu0
        %v504 = vadd.f32 0.0, %v503
        %v505 = vpop.f32.mrb[0].mxu0
        %v506 = vadd.f32 0.0, %v505
        %507 = vmatprep.mubr.f32.mxu0 0.0
        %508 = vmatmul.mubr.f32.gmra.mrb[0].mxu0 %v353
        %v509 = vpop.f32.mrb[0].mxu0
        %v510 = vadd.f32 0.0, %v509
        %v511 = vpop.f32.mrb[0].mxu0
        %v512 = vadd.f32 0.0, %v511
        %513 = vmatprep.mubr.f32.mxu0 0.0
        %514 = vmatmul.mubr.f32.gmra.mrb[0].mxu0 %v354
        %v515 = vpop.f32.mrb[0].mxu0
        %v516 = vadd.f32 0.0, %v515
        %v517 = vpop.f32.mrb[0].mxu0
        %v518 = vadd.f32 0.0, %v517
        %519 = vmatprep.mubr.f32.mxu0 0.0
        %520 = vmatmul.mubr.f32.gmra.mrb[0].mxu0 %v355
        %v521 = vpop.f32.mrb[0].mxu0
        %v522 = vadd.f32 0.0, %v521
        %v523 = vpop.f32.mrb[0].mxu0
        %v524 = vadd.f32 0.0, %v523
        %525 = vmatprep.mubr.f32.mxu0 0.0
        %526 = vmatmul.mubr.f32.gmra.mrb[0].mxu0 %v356
        %v527 = vpop.f32.mrb[0].mxu0
        %v528 = vadd.f32 0.0, %v527
        %v529 = vpop.f32.mrb[0].mxu0
        %v530 = vadd.f32 0.0, %v529
        %531 = vmatprep.mubr.f32.mxu0 0.0
        %532 = vmatmul.mubr.f32.gmra.mrb[0].mxu0 %v357
        %v533 = vpop.f32.mrb[0].mxu0
        %v534 = vadd.f32 0.0, %v533
        %v535 = vpop.f32.mrb[0].mxu0
        %v536 = vadd.f32 0.0, %v535
        %537 = vmatprep.mubr.f32.mxu0 0.0
        %538 = vmatmul.mubr.f32.gmra.mrb[0].mxu0 %v358
        %v539 = vpop.f32.mrb[0].mxu0
        %v540 = vadd.f32 0.0, %v539
        %v541 = vpop.f32.mrb[0].mxu0
        %v542 = vadd.f32 0.0, %v541
        %543 = vmatprep.mubr.f32.mxu0 0.0
        %544 = vmatmul.mubr.f32.gmra.mrb[0].mxu0 %v359
        %v545 = vpop.f32.mrb[0].mxu0
        %v546 = vadd.f32 0.0, %v545
        %v547 = vpop.f32.mrb[0].mxu0
        %v548 = vadd.f32 0.0, %v547
        %549 = vmatprep.mubr.f32.mxu0 0.0
        %550 = vmatmul.mubr.f32.gmra.mrb[0].mxu0 %v360
        %v551 = vpop.f32.mrb[0].mxu0
        %v552 = vadd.f32 0.0, %v551
        %v553 = vpop.f32.mrb[0].mxu0
        %v554 = vadd.f32 0.0, %v553
        %555 = vmatprep.mubr.f32.mxu0 0.0
        %556 = vmatmul.mubr.f32.gmra.mrb[0].mxu0 %v361
        %v557 = vpop.f32.mrb[0].mxu0
        %v558 = vadd.f32 0.0, %v557
        %v559 = vpop.f32.mrb[0].mxu0
        %v560 = vadd.f32 0.0, %v559
        %561 = vmatprep.mubr.f32.mxu0 0.0
        %562 = vmatmul.mubr.f32.gmra.mrb[0].mxu0 %v362
        %v563 = vpop.f32.mrb[0].mxu0
        %v564 = vadd.f32 0.0, %v563
        %v565 = vpop.f32.mrb[0].mxu0
        %v566 = vadd.f32 0.0, %v565
        %567 = vmatprep.mubr.f32.mxu0 0.0
        %568 = vmatmul.mubr.f32.gmra.mrb[0].mxu0 %v363
        %v569 = vpop.f32.mrb[0].mxu0
        %v570 = vadd.f32 0.0, %v569
        %v571 = vpop.f32.mrb[0].mxu0
        %v572 = vadd.f32 0.0, %v571
        %573 = vmatprep.mubr.f32.mxu0 0.0
        %574 = vmatmul.mubr.f32.gmra.mrb[0].mxu0 %v364
        %v575 = vpop.f32.mrb[0].mxu0
        %v576 = vadd.f32 0.0, %v575
        %v577 = vpop.f32.mrb[0].mxu0
        %v578 = vadd.f32 0.0, %v577
        %579 = vmatprep.mubr.f32.mxu0 0.0
        %580 = vmatmul.mubr.f32.gmra.mrb[0].mxu0 %v365
        %v581 = vpop.f32.mrb[0].mxu0
        %v582 = vadd.f32 0.0, %v581
        %v583 = vpop.f32.mrb[0].mxu0
        %v584 = vadd.f32 0.0, %v583
        %585 = vmatprep.mubr.f32.mxu0 0.0
        %586 = vmatmul.mubr.f32.gmra.mrb[0].mxu0 %v366
        %v587 = vpop.f32.mrb[0].mxu0
        %v588 = vadd.f32 0.0, %v587
        %v589 = vpop.f32.mrb[0].mxu0
        %v590 = vadd.f32 0.0, %v589
        %591 = vdwg.mxu0
        %592 = vmatprep.subr.mxu0 0.0
        %593 = vmatpush1.xpose.msra.mxu0 %v399
        %594 = vmatprep.subr.mxu0 0.0
        %595 = vmatpush1.xpose.msra.mxu0 %v400
        %596 = vmatprep.subr.mxu0 0.0
        %597 = vmatpush1.xpose.msra.mxu0 %v401
        %598 = vmatprep.subr.mxu0 0.0
        %599 = vmatpush1.xpose.msra.mxu0 %v402
        %600 = vmatprep.subr.mxu0 0.0
        %601 = vmatpush1.xpose.msra.mxu0 %v403
        %602 = vmatprep.subr.mxu0 0.0
        %603 = vmatpush1.xpose.msra.mxu0 %v404
        %604 = vmatprep.subr.mxu0 0.0
        %605 = vmatpush1.xpose.msra.mxu0 %v405
        %606 = vmatprep.subr.mxu0 0.0
        %607 = vmatpush1.xpose.msra.mxu0 %v406
        %608 = vmatprep.subr.mxu0 0.0
        %609 = vmatpush1.xpose.msra.mxu0 %v407
        %610 = vmatprep.subr.mxu0 0.0
        %611 = vmatpush1.xpose.msra.mxu0 %v408
        %612 = vmatprep.subr.mxu0 0.0
        %613 = vmatpush1.xpose.msra.mxu0 %v409
        %614 = vmatprep.subr.mxu0 0.0
        %615 = vmatpush1.xpose.msra.mxu0 %v410
        %616 = vmatprep.subr.mxu0 0.0
        %617 = vmatpush1.xpose.msra.mxu0 %v411
        %618 = vmatprep.subr.mxu0 0.0
        %619 = vmatpush1.xpose.msra.mxu0 %v412
        %620 = vmatprep.subr.mxu0 0.0
        %621 = vmatpush1.xpose.msra.mxu0 %v413
        %622 = vmatprep.subr.mxu0 0.0
        %623 = vmatpush1.xpose.msra.mxu0 %v414
        %624 = vmatprep.subr.mxu0 0.0
        %625 = vmatpush1.xpose.msra.mxu0 %v415
        %626 = vmatprep.subr.mxu0 0.0
        %627 = vmatpush1.xpose.msra.mxu0 %v416
        %628 = vmatprep.subr.mxu0 0.0
        %629 = vmatpush1.xpose.msra.mxu0 %v417
        %630 = vmatprep.subr.mxu0 0.0
        %631 = vmatpush1.xpose.msra.mxu0 %v418
        %632 = vmatprep.subr.mxu0 0.0
        %633 = vmatpush1.xpose.msra.mxu0 %v419
        %634 = vmatprep.subr.mxu0 0.0
        %635 = vmatpush1.xpose.msra.mxu0 %v420
        %636 = vmatprep.subr.mxu0 0.0
        %637 = vmatpush1.xpose.msra.mxu0 %v421
        %638 = vmatprep.subr.mxu0 0.0
        %639 = vmatpush1.xpose.msra.mxu0 %v422
        %640 = vmatprep.subr.mxu0 0.0
        %641 = vmatpush1.xpose.msra.mxu0 %v423
        %642 = vmatprep.subr.mxu0 0.0
        %643 = vmatpush1.xpose.msra.mxu0 %v424
        %644 = vmatprep.subr.mxu0 0.0
        %645 = vmatpush1.xpose.msra.mxu0 %v425
        %646 = vmatprep.subr.mxu0 0.0
        %647 = vmatpush1.xpose.msra.mxu0 %v426
        %648 = vmatprep.subr.mxu0 0.0
        %649 = vmatpush1.xpose.msra.mxu0 %v427
        %650 = vmatprep.subr.mxu0 0.0
        %651 = vmatpush1.xpose.msra.mxu0 %v428
        %652 = vmatprep.subr.mxu0 0.0
        %653 = vmatpush1.xpose.msra.mxu0 %v429
        %654 = vmatprep.subr.mxu0 0.0
        %655 = vmatpush1.xpose.msra.mxu0 %v430
        %656 = vmatprep.mubr.f32.mxu0 0.0
        %657 = vmatmul.mubr.f32.gmra.mrb[0].mxu0 %v351
        %v658 = vpop.f32.mrb[0].mxu0
        %v659 = vadd.f32 0.0, %v658
        %v660 = vpop.f32.mrb[0].mxu0
        %v661 = vadd.f32 0.0, %v660
        %662 = vmatprep.mubr.f32.mxu0 0.0
        %663 = vmatmul.mubr.f32.gmra.mrb[0].mxu0 %v352
        %v664 = vpop.f32.mrb[0].mxu0
        %v665 = vadd.f32 0.0, %v664
        %v666 = vpop.f32.mrb[0].mxu0
        %v667 = vadd.f32 0.0, %v666
        %668 = vmatprep.mubr.f32.mxu0 0.0
        %669 = vmatmul.mubr.f32.gmra.mrb[0].mxu0 %v353
        %v670 = vpop.f32.mrb[0].mxu0
        %v671 = vadd.f32 0.0, %v670
        %v672 = vpop.f32.mrb[0].mxu0
        %v673 = vadd.f32 0.0, %v672
        %674 = vmatprep.mubr.f32.mxu0 0.0
        %675 = vmatmul.mubr.f32.gmra.mrb[0].mxu0 %v354
        %v676 = vpop.f32.mrb[0].mxu0
        %v677 = vadd.f32 0.0, %v676
        %v678 = vpop.f32.mrb[0].mxu0
        %v679 = vadd.f32 0.0, %v678
        %680 = vmatprep.mubr.f32.mxu0 0.0
        %681 = vmatmul.mubr.f32.gmra.mrb[0].mxu0 %v355
        %v682 = vpop.f32.mrb[0].mxu0
        %v683 = vadd.f32 0.0, %v682
        %v684 = vpop.f32.mrb[0].mxu0
        %v685 = vadd.f32 0.0, %v684
        %686 = vmatprep.mubr.f32.mxu0 0.0
        %687 = vmatmul.mubr.f32.gmra.mrb[0].mxu0 %v356
        %v688 = vpop.f32.mrb[0].mxu0
        %v689 = vadd.f32 0.0, %v688
        %v690 = vpop.f32.mrb[0].mxu0
        %v691 = vadd.f32 0.0, %v690
        %692 = vmatprep.mubr.f32.mxu0 0.0
        %693 = vmatmul.mubr.f32.gmra.mrb[0].mxu0 %v357
        %v694 = vpop.f32.mrb[0].mxu0
        %v695 = vadd.f32 0.0, %v694
        %v696 = vpop.f32.mrb[0].mxu0
        %v697 = vadd.f32 0.0, %v696
        %698 = vmatprep.mubr.f32.mxu0 0.0
        %699 = vmatmul.mubr.f32.gmra.mrb[0].mxu0 %v358
        %v700 = vpop.f32.mrb[0].mxu0
        %v701 = vadd.f32 0.0, %v700
        %v702 = vpop.f32.mrb[0].mxu0
        %v703 = vadd.f32 0.0, %v702
        %704 = vmatprep.mubr.f32.mxu0 0.0
        %705 = vmatmul.mubr.f32.gmra.mrb[0].mxu0 %v359
        %v706 = vpop.f32.mrb[0].mxu0
        %v707 = vadd.f32 0.0, %v706
        %v708 = vpop.f32.mrb[0].mxu0
        %v709 = vadd.f32 0.0, %v708
        %710 = vmatprep.mubr.f32.mxu0 0.0
        %711 = vmatmul.mubr.f32.gmra.mrb[0].mxu0 %v360
        %v712 = vpop.f32.mrb[0].mxu0
        %v713 = vadd.f32 0.0, %v712
        %v714 = vpop.f32.mrb[0].mxu0
        %v715 = vadd.f32 0.0, %v714
        %716 = vmatprep.mubr.f32.mxu0 0.0
        %717 = vmatmul.mubr.f32.gmra.mrb[0].mxu0 %v361
        %v718 = vpop.f32.mrb[0].mxu0
        %v719 = vadd.f32 0.0, %v718
        %v720 = vpop.f32.mrb[0].mxu0
        %v721 = vadd.f32 0.0, %v720
        %722 = vmatprep.mubr.f32.mxu0 0.0
        %723 = vmatmul.mubr.f32.gmra.mrb[0].mxu0 %v362
        %v724 = vpop.f32.mrb[0].mxu0
        %v725 = vadd.f32 0.0, %v724
        %v726 = vpop.f32.mrb[0].mxu0
        %v727 = vadd.f32 0.0, %v726
        %728 = vmatprep.mubr.f32.mxu0 0.0
        %729 = vmatmul.mubr.f32.gmra.mrb[0].mxu0 %v363
        %v730 = vpop.f32.mrb[0].mxu0
        %v731 = vadd.f32 0.0, %v730
        %v732 = vpop.f32.mrb[0].mxu0
        %v733 = vadd.f32 0.0, %v732
        %734 = vmatprep.mubr.f32.mxu0 0.0
        %735 = vmatmul.mubr.f32.gmra.mrb[0].mxu0 %v364
        %v736 = vpop.f32.mrb[0].mxu0
        %v737 = vadd.f32 0.0, %v736
        %v738 = vpop.f32.mrb[0].mxu0
        %v739 = vadd.f32 0.0, %v738
        %740 = vmatprep.mubr.f32.mxu0 0.0
        %741 = vmatmul.mubr.f32.gmra.mrb[0].mxu0 %v365
        %v742 = vpop.f32.mrb[0].mxu0
        %v743 = vadd.f32 0.0, %v742
        %v744 = vpop.f32.mrb[0].mxu0
        %v745 = vadd.f32 0.0, %v744
        %746 = vmatprep.mubr.f32.mxu0 0.0
        %747 = vmatmul.mubr.f32.gmra.mrb[0].mxu0 %v366
        %v748 = vpop.f32.mrb[0].mxu0
        %v749 = vadd.f32 0.0, %v748
        %v750 = vpop.f32.mrb[0].mxu0
        %v751 = vadd.f32 0.0, %v750
        %752 = vdwg.mxu0
        %v753 = vld [vmem:[#allocation2] sm:$0xff]
        %v754 = vld [vmem:[#allocation2 + $0x8] sm:$0xff]
        %v755 = vld [vmem:[#allocation2 + $0x10] sm:$0xff]
        %v756 = vld [vmem:[#allocation2 + $0x18] sm:$0xff]
        %v757 = vld [vmem:[#allocation2 + $0x20] sm:$0xff]
        %v758 = vld [vmem:[#allocation2 + $0x28] sm:$0xff]
        %v759 = vld [vmem:[#allocation2 + $0x30] sm:$0xff]
        %v760 = vld [vmem:[#allocation2 + $0x38] sm:$0xff]
        %v761 = vld [vmem:[#allocation2 + $0x40] sm:$0xff]
        %v762 = vld [vmem:[#allocation2 + $0x48] sm:$0xff]
        %v763 = vld [vmem:[#allocation2 + $0x50] sm:$0xff]
        %v764 = vld [vmem:[#allocation2 + $0x58] sm:$0xff]
        %v765 = vld [vmem:[#allocation2 + $0x60] sm:$0xff]
        %v766 = vld [vmem:[#allocation2 + $0x68] sm:$0xff]
        %v767 = vld [vmem:[#allocation2 + $0x70] sm:$0xff]
        %v768 = vld [vmem:[#allocation2 + $0x78] sm:$0xff]
        %v769 = vmax.f32 %v498, %v500
        %v770 = vmax.f32 %v769, %v659
        %v771 = vmax.f32 %v770, %v661
        %772 = vmax.xlane.f32.xlu0 %v771
        %v773 = vpop.xlane.xlu0 %772
        %v774 = vmax.f32 %v504, %v506
        %v775 = vmax.f32 %v774, %v665
        %v776 = vmax.f32 %v775, %v667
        %777 = vmax.xlane.f32.xlu0 %v776
        %v778 = vpop.xlane.xlu0 %777
        %v779 = vmax.f32 %v510, %v512
        %v780 = vmax.f32 %v779, %v671
        %v781 = vmax.f32 %v780, %v673
        %782 = vmax.xlane.f32.xlu0 %v781
        %v783 = vpop.xlane.xlu0 %782
        %v784 = vmax.f32 %v516, %v518
        %v785 = vmax.f32 %v784, %v677
        %v786 = vmax.f32 %v785, %v679
        %787 = vmax.xlane.f32.xlu0 %v786
        %v788 = vpop.xlane.xlu0 %787
        %v789 = vmax.f32 %v522, %v524
        %v790 = vmax.f32 %v789, %v683
        %v791 = vmax.f32 %v790, %v685
        %792 = vmax.xlane.f32.xlu0 %v791
        %v793 = vpop.xlane.xlu0 %792
        %v794 = vmax.f32 %v528, %v530
        %v795 = vmax.f32 %v794, %v689
        %v796 = vmax.f32 %v795, %v691
        %797 = vmax.xlane.f32.xlu0 %v796
        %v798 = vpop.xlane.xlu0 %797
        %v799 = vmax.f32 %v534, %v536
        %v800 = vmax.f32 %v799, %v695
        %v801 = vmax.f32 %v800, %v697
        %802 = vmax.xlane.f32.xlu0 %v801
        %v803 = vpop.xlane.xlu0 %802
        %v804 = vmax.f32 %v540, %v542
        %v805 = vmax.f32 %v804, %v701
        %v806 = vmax.f32 %v805, %v703
        %807 = vmax.xlane.f32.xlu0 %v806
        %v808 = vpop.xlane.xlu0 %807
        %v809 = vmax.f32 %v546, %v548
        %v810 = vmax.f32 %v809, %v707
        %v811 = vmax.f32 %v810, %v709
        %812 = vmax.xlane.f32.xlu0 %v811
        %v813 = vpop.xlane.xlu0 %812
        %v814 = vmax.f32 %v552, %v554
        %v815 = vmax.f32 %v814, %v713
        %v816 = vmax.f32 %v815, %v715
        %817 = vmax.xlane.f32.xlu0 %v816
        %v818 = vpop.xlane.xlu0 %817
        %v819 = vmax.f32 %v558, %v560
        %v820 = vmax.f32 %v819, %v719
        %v821 = vmax.f32 %v820, %v721
        %822 = vmax.xlane.f32.xlu0 %v821
        %v823 = vpop.xlane.xlu0 %822
        %v824 = vmax.f32 %v564, %v566
        %v825 = vmax.f32 %v824, %v725
        %v826 = vmax.f32 %v825, %v727
        %827 = vmax.xlane.f32.xlu0 %v826
        %v828 = vpop.xlane.xlu0 %827
        %v829 = vmax.f32 %v570, %v572
        %v830 = vmax.f32 %v829, %v731
        %v831 = vmax.f32 %v830, %v733
        %832 = vmax.xlane.f32.xlu0 %v831
        %v833 = vpop.xlane.xlu0 %832
        %v834 = vmax.f32 %v576, %v578
        %v835 = vmax.f32 %v834, %v737
        %v836 = vmax.f32 %v835, %v739
        %837 = vmax.xlane.f32.xlu0 %v836
        %v838 = vpop.xlane.xlu0 %837
        %v839 = vmax.f32 %v582, %v584
        %v840 = vmax.f32 %v839, %v743
        %v841 = vmax.f32 %v840, %v745
        %842 = vmax.xlane.f32.xlu0 %v841
        %v843 = vpop.xlane.xlu0 %842
        %v844 = vmax.f32 %v588, %v590
        %v845 = vmax.f32 %v844, %v749
        %v846 = vmax.f32 %v845, %v751
        %847 = vmax.xlane.f32.xlu0 %v846
        %v848 = vpop.xlane.xlu0 %847
        %v849 = vmax.f32 %v753, %v773
        %v850 = vmax.f32 %v754, %v778
        %v851 = vmax.f32 %v755, %v783
        %v852 = vmax.f32 %v756, %v788
        %v853 = vmax.f32 %v757, %v793
        %v854 = vmax.f32 %v758, %v798
        %v855 = vmax.f32 %v759, %v803
        %v856 = vmax.f32 %v760, %v808
        %v857 = vmax.f32 %v761, %v813
        %v858 = vmax.f32 %v762, %v818
        %v859 = vmax.f32 %v763, %v823
        %v860 = vmax.f32 %v764, %v828
        %v861 = vmax.f32 %v765, %v833
        %v862 = vmax.f32 %v766, %v838
        %v863 = vmax.f32 %v767, %v843
        %v864 = vmax.f32 %v768, %v848
        %v865 = vsub.f32 %v753, %v849
        %v866 = vsub.f32 %v754, %v850
        %v867 = vsub.f32 %v755, %v851
        %v868 = vsub.f32 %v756, %v852
        %v869 = vsub.f32 %v757, %v853
        %v870 = vsub.f32 %v758, %v854
        %v871 = vsub.f32 %v759, %v855
        %v872 = vsub.f32 %v760, %v856
        %v873 = vsub.f32 %v761, %v857
        %v874 = vsub.f32 %v762, %v858
        %v875 = vsub.f32 %v763, %v859
        %v876 = vsub.f32 %v764, %v860
        %v877 = vsub.f32 %v765, %v861
        %v878 = vsub.f32 %v766, %v862
        %v879 = vsub.f32 %v767, %v863
        %v880 = vsub.f32 %v768, %v864
        %v881 = vmul.f32 %v865, 1.442695
        %v882 = vpow.pop %v881
        %v883 = vmul.f32 %v866, 1.442695
        %v884 = vpow.pop %v883
        %v885 = vmul.f32 %v867, 1.442695
        %v886 = vpow.pop %v885
        %v887 = vmul.f32 %v868, 1.442695
        %v888 = vpow.pop %v887
        %v889 = vmul.f32 %v869, 1.442695
        %v890 = vpow.pop %v889
        %v891 = vmul.f32 %v870, 1.442695
        %v892 = vpow.pop %v891
        %v893 = vmul.f32 %v871, 1.442695
        %v894 = vpow.pop %v893
        %v895 = vmul.f32 %v872, 1.442695
        %v896 = vpow.pop %v895
        %v897 = vmul.f32 %v873, 1.442695
        %v898 = vpow.pop %v897
        %v899 = vmul.f32 %v874, 1.442695
        %v900 = vpow.pop %v899
        %v901 = vmul.f32 %v875, 1.442695
        %v902 = vpow.pop %v901
        %v903 = vmul.f32 %v876, 1.442695
        %v904 = vpow.pop %v903
        %v905 = vmul.f32 %v877, 1.442695
        %v906 = vpow.pop %v905
        %v907 = vmul.f32 %v878, 1.442695
        %v908 = vpow.pop %v907
        %v909 = vmul.f32 %v879, 1.442695
        %v910 = vpow.pop %v909
        %v911 = vmul.f32 %v880, 1.442695
        %v912 = vpow.pop %v911
        %914 = vset.pattern.permute.xlu0 0
        %915 = vperm.xlu0 %914, %v849
        %v916 = vpop.permute.xlu0 %915
        %919 = vset.pattern.permute.xlu0 0
        %920 = vperm.xlu0 %919, %v850
        %v921 = vpop.permute.xlu0 %920
        %924 = vset.pattern.permute.xlu0 0
        %925 = vperm.xlu0 %924, %v851
        %v926 = vpop.permute.xlu0 %925
        %929 = vset.pattern.permute.xlu0 0
        %930 = vperm.xlu0 %929, %v852
        %v931 = vpop.permute.xlu0 %930
        %934 = vset.pattern.permute.xlu0 0
        %935 = vperm.xlu0 %934, %v853
        %v936 = vpop.permute.xlu0 %935
        %939 = vset.pattern.permute.xlu0 0
        %940 = vperm.xlu0 %939, %v854
        %v941 = vpop.permute.xlu0 %940
        %944 = vset.pattern.permute.xlu0 0
        %945 = vperm.xlu0 %944, %v855
        %v946 = vpop.permute.xlu0 %945
        %949 = vset.pattern.permute.xlu0 0
        %950 = vperm.xlu0 %949, %v856
        %v951 = vpop.permute.xlu0 %950
        %954 = vset.pattern.permute.xlu0 0
        %955 = vperm.xlu0 %954, %v857
        %v956 = vpop.permute.xlu0 %955
        %959 = vset.pattern.permute.xlu0 0
        %960 = vperm.xlu0 %959, %v858
        %v961 = vpop.permute.xlu0 %960
        %964 = vset.pattern.permute.xlu0 0
        %965 = vperm.xlu0 %964, %v859
        %v966 = vpop.permute.xlu0 %965
        %969 = vset.pattern.permute.xlu0 0
        %970 = vperm.xlu0 %969, %v860
        %v971 = vpop.permute.xlu0 %970
        %974 = vset.pattern.permute.xlu0 0
        %975 = vperm.xlu0 %974, %v861
        %v976 = vpop.permute.xlu0 %975
        %979 = vset.pattern.permute.xlu0 0
        %980 = vperm.xlu0 %979, %v862
        %v981 = vpop.permute.xlu0 %980
        %984 = vset.pattern.permute.xlu0 0
        %985 = vperm.xlu0 %984, %v863
        %v986 = vpop.permute.xlu0 %985
        %989 = vset.pattern.permute.xlu0 0
        %990 = vperm.xlu0 %989, %v864
        %v991 = vpop.permute.xlu0 %990
        %v993 = vsub.f32 %v498, %v916
        %v994 = vsub.f32 %v500, %v916
        %v995 = vsub.f32 %v659, %v916
        %v996 = vsub.f32 %v661, %v916
        %v997 = vsub.f32 %v504, %v921
        %v998 = vsub.f32 %v506, %v921
        %v999 = vsub.f32 %v665, %v921
        %v1000 = vsub.f32 %v667, %v921
        %v1001 = vsub.f32 %v510, %v926
        %v1002 = vsub.f32 %v512, %v926
        %v1003 = vsub.f32 %v671, %v926
        %v1004 = vsub.f32 %v673, %v926
        %v1005 = vsub.f32 %v516, %v931
        %v1006 = vsub.f32 %v518, %v931
        %v1007 = vsub.f32 %v677, %v931
        %v1008 = vsub.f32 %v679, %v931
        %v1009 = vsub.f32 %v522, %v936
        %v1010 = vsub.f32 %v524, %v936
        %v1011 = vsub.f32 %v683, %v936
        %v1012 = vsub.f32 %v685, %v936
        %v1013 = vsub.f32 %v528, %v941
        %v1014 = vsub.f32 %v530, %v941
        %v1015 = vsub.f32 %v689, %v941
        %v1016 = vsub.f32 %v691, %v941
        %v1017 = vsub.f32 %v534, %v946
        %v1018 = vsub.f32 %v536, %v946
        %v1019 = vsub.f32 %v695, %v946
        %v1020 = vsub.f32 %v697, %v946
        %v1021 = vsub.f32 %v540, %v951
        %v1022 = vsub.f32 %v542, %v951
        %v1023 = vsub.f32 %v701, %v951
        %v1024 = vsub.f32 %v703, %v951
        %v1025 = vsub.f32 %v546, %v956
        %v1026 = vsub.f32 %v548, %v956
        %v1027 = vsub.f32 %v707, %v956
        %v1028 = vsub.f32 %v709, %v956
        %v1029 = vsub.f32 %v552, %v961
        %v1030 = vsub.f32 %v554, %v961
        %v1031 = vsub.f32 %v713, %v961
        %v1032 = vsub.f32 %v715, %v961
        %v1033 = vsub.f32 %v558, %v966
        %v1034 = vsub.f32 %v560, %v966
        %v1035 = vsub.f32 %v719, %v966
        %v1036 = vsub.f32 %v721, %v966
        %v1037 = vsub.f32 %v564, %v971
        %v1038 = vsub.f32 %v566, %v971
        %v1039 = vsub.f32 %v725, %v971
        %v1040 = vsub.f32 %v727, %v971
        %v1041 = vsub.f32 %v570, %v976
        %v1042 = vsub.f32 %v572, %v976
        %v1043 = vsub.f32 %v731, %v976
        %v1044 = vsub.f32 %v733, %v976
        %v1045 = vsub.f32 %v576, %v981
        %v1046 = vsub.f32 %v578, %v981
        %v1047 = vsub.f32 %v737, %v981
        %v1048 = vsub.f32 %v739, %v981
        %v1049 = vsub.f32 %v582, %v986
        %v1050 = vsub.f32 %v584, %v986
        %v1051 = vsub.f32 %v743, %v986
        %v1052 = vsub.f32 %v745, %v986
        %v1053 = vsub.f32 %v588, %v991
        %v1054 = vsub.f32 %v590, %v991
        %v1055 = vsub.f32 %v749, %v991
        %v1056 = vsub.f32 %v751, %v991
        %v1057 = vmul.f32 %v993, 1.442695
        %v1058 = vpow.pop %v1057
        %v1059 = vmul.f32 %v994, 1.442695
        %v1060 = vpow.pop %v1059
        %v1061 = vmul.f32 %v995, 1.442695
        %v1062 = vpow.pop %v1061
        %v1063 = vmul.f32 %v996, 1.442695
        %v1064 = vpow.pop %v1063
        %v1065 = vmul.f32 %v997, 1.442695
        %v1066 = vpow.pop %v1065
        %v1067 = vmul.f32 %v998, 1.442695
        %v1068 = vpow.pop %v1067
        %v1069 = vmul.f32 %v999, 1.442695
        %v1070 = vpow.pop %v1069
        %v1071 = vmul.f32 %v1000, 1.442695
        %v1072 = vpow.pop %v1071
        %v1073 = vmul.f32 %v1001, 1.442695
        %v1074 = vpow.pop %v1073
        %v1075 = vmul.f32 %v1002, 1.442695
        %v1076 = vpow.pop %v1075
        %v1077 = vmul.f32 %v1003, 1.442695
        %v1078 = vpow.pop %v1077
        %v1079 = vmul.f32 %v1004, 1.442695
        %v1080 = vpow.pop %v1079
        %v1081 = vmul.f32 %v1005, 1.442695
        %v1082 = vpow.pop %v1081
        %v1083 = vmul.f32 %v1006, 1.442695
        %v1084 = vpow.pop %v1083
        %v1085 = vmul.f32 %v1007, 1.442695
        %v1086 = vpow.pop %v1085
        %v1087 = vmul.f32 %v1008, 1.442695
        %v1088 = vpow.pop %v1087
        %v1089 = vmul.f32 %v1009, 1.442695
        %v1090 = vpow.pop %v1089
        %v1091 = vmul.f32 %v1010, 1.442695
        %v1092 = vpow.pop %v1091
        %v1093 = vmul.f32 %v1011, 1.442695
        %v1094 = vpow.pop %v1093
        %v1095 = vmul.f32 %v1012, 1.442695
        %v1096 = vpow.pop %v1095
        %v1097 = vmul.f32 %v1013, 1.442695
        %v1098 = vpow.pop %v1097
        %v1099 = vmul.f32 %v1014, 1.442695
        %v1100 = vpow.pop %v1099
        %v1101 = vmul.f32 %v1015, 1.442695
        %v1102 = vpow.pop %v1101
        %v1103 = vmul.f32 %v1016, 1.442695
        %v1104 = vpow.pop %v1103
        %v1105 = vmul.f32 %v1017, 1.442695
        %v1106 = vpow.pop %v1105
        %v1107 = vmul.f32 %v1018, 1.442695
        %v1108 = vpow.pop %v1107
        %v1109 = vmul.f32 %v1019, 1.442695
        %v1110 = vpow.pop %v1109
        %v1111 = vmul.f32 %v1020, 1.442695
        %v1112 = vpow.pop %v1111
        %v1113 = vmul.f32 %v1021, 1.442695
        %v1114 = vpow.pop %v1113
        %v1115 = vmul.f32 %v1022, 1.442695
        %v1116 = vpow.pop %v1115
        %v1117 = vmul.f32 %v1023, 1.442695
        %v1118 = vpow.pop %v1117
        %v1119 = vmul.f32 %v1024, 1.442695
        %v1120 = vpow.pop %v1119
        %v1121 = vmul.f32 %v1025, 1.442695
        %v1122 = vpow.pop %v1121
        %v1123 = vmul.f32 %v1026, 1.442695
        %v1124 = vpow.pop %v1123
        %v1125 = vmul.f32 %v1027, 1.442695
        %v1126 = vpow.pop %v1125
        %v1127 = vmul.f32 %v1028, 1.442695
        %v1128 = vpow.pop %v1127
        %v1129 = vmul.f32 %v1029, 1.442695
        %v1130 = vpow.pop %v1129
        %v1131 = vmul.f32 %v1030, 1.442695
        %v1132 = vpow.pop %v1131
        %v1133 = vmul.f32 %v1031, 1.442695
        %v1134 = vpow.pop %v1133
        %v1135 = vmul.f32 %v1032, 1.442695
        %v1136 = vpow.pop %v1135
        %v1137 = vmul.f32 %v1033, 1.442695
        %v1138 = vpow.pop %v1137
        %v1139 = vmul.f32 %v1034, 1.442695
        %v1140 = vpow.pop %v1139
        %v1141 = vmul.f32 %v1035, 1.442695
        %v1142 = vpow.pop %v1141
        %v1143 = vmul.f32 %v1036, 1.442695
        %v1144 = vpow.pop %v1143
        %v1145 = vmul.f32 %v1037, 1.442695
        %v1146 = vpow.pop %v1145
        %v1147 = vmul.f32 %v1038, 1.442695
        %v1148 = vpow.pop %v1147
        %v1149 = vmul.f32 %v1039, 1.442695
        %v1150 = vpow.pop %v1149
        %v1151 = vmul.f32 %v1040, 1.442695
        %v1152 = vpow.pop %v1151
        %v1153 = vmul.f32 %v1041, 1.442695
        %v1154 = vpow.pop %v1153
        %v1155 = vmul.f32 %v1042, 1.442695
        %v1156 = vpow.pop %v1155
        %v1157 = vmul.f32 %v1043, 1.442695
        %v1158 = vpow.pop %v1157
        %v1159 = vmul.f32 %v1044, 1.442695
        %v1160 = vpow.pop %v1159
        %v1161 = vmul.f32 %v1045, 1.442695
        %v1162 = vpow.pop %v1161
        %v1163 = vmul.f32 %v1046, 1.442695
        %v1164 = vpow.pop %v1163
        %v1165 = vmul.f32 %v1047, 1.442695
        %v1166 = vpow.pop %v1165
        %v1167 = vmul.f32 %v1048, 1.442695
        %v1168 = vpow.pop %v1167
        %v1169 = vmul.f32 %v1049, 1.442695
        %v1170 = vpow.pop %v1169
        %v1171 = vmul.f32 %v1050, 1.442695
        %v1172 = vpow.pop %v1171
        %v1173 = vmul.f32 %v1051, 1.442695
        %v1174 = vpow.pop %v1173
        %v1175 = vmul.f32 %v1052, 1.442695
        %v1176 = vpow.pop %v1175
        %v1177 = vmul.f32 %v1053, 1.442695
        %v1178 = vpow.pop %v1177
        %v1179 = vmul.f32 %v1054, 1.442695
        %v1180 = vpow.pop %v1179
        %v1181 = vmul.f32 %v1055, 1.442695
        %v1182 = vpow.pop %v1181
        %v1183 = vmul.f32 %v1056, 1.442695
        %v1184 = vpow.pop %v1183
        %v1185 = vld [vmem:[#allocation3] sm:$0xff]
        %v1186 = vld [vmem:[#allocation3 + $0x8] sm:$0xff]
        %v1187 = vld [vmem:[#allocation3 + $0x10] sm:$0xff]
        %v1188 = vld [vmem:[#allocation3 + $0x18] sm:$0xff]
        %v1189 = vld [vmem:[#allocation3 + $0x20] sm:$0xff]
        %v1190 = vld [vmem:[#allocation3 + $0x28] sm:$0xff]
        %v1191 = vld [vmem:[#allocation3 + $0x30] sm:$0xff]
        %v1192 = vld [vmem:[#allocation3 + $0x38] sm:$0xff]
        %v1193 = vld [vmem:[#allocation3 + $0x40] sm:$0xff]
        %v1194 = vld [vmem:[#allocation3 + $0x48] sm:$0xff]
        %v1195 = vld [vmem:[#allocation3 + $0x50] sm:$0xff]
        %v1196 = vld [vmem:[#allocation3 + $0x58] sm:$0xff]
        %v1197 = vld [vmem:[#allocation3 + $0x60] sm:$0xff]
        %v1198 = vld [vmem:[#allocation3 + $0x68] sm:$0xff]
        %v1199 = vld [vmem:[#allocation3 + $0x70] sm:$0xff]
        %v1200 = vld [vmem:[#allocation3 + $0x78] sm:$0xff]
        %v1201 = vmul.f32 %v882, %v1185
        %v1202 = vmul.f32 %v884, %v1186
        %v1203 = vmul.f32 %v886, %v1187
        %v1204 = vmul.f32 %v888, %v1188
        %v1205 = vmul.f32 %v890, %v1189
        %v1206 = vmul.f32 %v892, %v1190
        %v1207 = vmul.f32 %v894, %v1191
        %v1208 = vmul.f32 %v896, %v1192
        %v1209 = vmul.f32 %v898, %v1193
        %v1210 = vmul.f32 %v900, %v1194
        %v1211 = vmul.f32 %v902, %v1195
        %v1212 = vmul.f32 %v904, %v1196
        %v1213 = vmul.f32 %v906, %v1197
        %v1214 = vmul.f32 %v908, %v1198
        %v1215 = vmul.f32 %v910, %v1199
        %v1216 = vmul.f32 %v912, %v1200
        %v1217 = vadd.f32 %v1058, %v1060
        %v1218 = vadd.f32 %v1217, %v1062
        %v1219 = vadd.f32 %v1218, %v1064
        %1220 = vadd.xlane.f32.xlu0 %v1219
        %v1221 = vpop.xlane.xlu0 %1220
        %v1222 = vadd.f32 %v1066, %v1068
        %v1223 = vadd.f32 %v1222, %v1070
        %v1224 = vadd.f32 %v1223, %v1072
        %1225 = vadd.xlane.f32.xlu0 %v1224
        %v1226 = vpop.xlane.xlu0 %1225
        %v1227 = vadd.f32 %v1074, %v1076
        %v1228 = vadd.f32 %v1227, %v1078
        %v1229 = vadd.f32 %v1228, %v1080
        %1230 = vadd.xlane.f32.xlu0 %v1229
        %v1231 = vpop.xlane.xlu0 %1230
        %v1232 = vadd.f32 %v1082, %v1084
        %v1233 = vadd.f32 %v1232, %v1086
        %v1234 = vadd.f32 %v1233, %v1088
        %1235 = vadd.xlane.f32.xlu0 %v1234
        %v1236 = vpop.xlane.xlu0 %1235
        %v1237 = vadd.f32 %v1090, %v1092
        %v1238 = vadd.f32 %v1237, %v1094
        %v1239 = vadd.f32 %v1238, %v1096
        %1240 = vadd.xlane.f32.xlu0 %v1239
        %v1241 = vpop.xlane.xlu0 %1240
        %v1242 = vadd.f32 %v1098, %v1100
        %v1243 = vadd.f32 %v1242, %v1102
        %v1244 = vadd.f32 %v1243, %v1104
        %1245 = vadd.xlane.f32.xlu0 %v1244
        %v1246 = vpop.xlane.xlu0 %1245
        %v1247 = vadd.f32 %v1106, %v1108
        %v1248 = vadd.f32 %v1247, %v1110
        %v1249 = vadd.f32 %v1248, %v1112
        %1250 = vadd.xlane.f32.xlu0 %v1249
        %v1251 = vpop.xlane.xlu0 %1250
        %v1252 = vadd.f32 %v1114, %v1116
        %v1253 = vadd.f32 %v1252, %v1118
        %v1254 = vadd.f32 %v1253, %v1120
        %1255 = vadd.xlane.f32.xlu0 %v1254
        %v1256 = vpop.xlane.xlu0 %1255
        %v1257 = vadd.f32 %v1122, %v1124
        %v1258 = vadd.f32 %v1257, %v1126
        %v1259 = vadd.f32 %v1258, %v1128
        %1260 = vadd.xlane.f32.xlu0 %v1259
        %v1261 = vpop.xlane.xlu0 %1260
        %v1262 = vadd.f32 %v1130, %v1132
        %v1263 = vadd.f32 %v1262, %v1134
        %v1264 = vadd.f32 %v1263, %v1136
        %1265 = vadd.xlane.f32.xlu0 %v1264
        %v1266 = vpop.xlane.xlu0 %1265
        %v1267 = vadd.f32 %v1138, %v1140
        %v1268 = vadd.f32 %v1267, %v1142
        %v1269 = vadd.f32 %v1268, %v1144
        %1270 = vadd.xlane.f32.xlu0 %v1269
        %v1271 = vpop.xlane.xlu0 %1270
        %v1272 = vadd.f32 %v1146, %v1148
        %v1273 = vadd.f32 %v1272, %v1150
        %v1274 = vadd.f32 %v1273, %v1152
        %1275 = vadd.xlane.f32.xlu0 %v1274
        %v1276 = vpop.xlane.xlu0 %1275
        %v1277 = vadd.f32 %v1154, %v1156
        %v1278 = vadd.f32 %v1277, %v1158
        %v1279 = vadd.f32 %v1278, %v1160
        %1280 = vadd.xlane.f32.xlu0 %v1279
        %v1281 = vpop.xlane.xlu0 %1280
        %v1282 = vadd.f32 %v1162, %v1164
        %v1283 = vadd.f32 %v1282, %v1166
        %v1284 = vadd.f32 %v1283, %v1168
        %1285 = vadd.xlane.f32.xlu0 %v1284
        %v1286 = vpop.xlane.xlu0 %1285
        %v1287 = vadd.f32 %v1170, %v1172
        %v1288 = vadd.f32 %v1287, %v1174
        %v1289 = vadd.f32 %v1288, %v1176
        %1290 = vadd.xlane.f32.xlu0 %v1289
        %v1291 = vpop.xlane.xlu0 %1290
        %v1292 = vadd.f32 %v1178, %v1180
        %v1293 = vadd.f32 %v1292, %v1182
        %v1294 = vadd.f32 %v1293, %v1184
        %1295 = vadd.xlane.f32.xlu0 %v1294
        %v1296 = vpop.xlane.xlu0 %1295
        %v1297 = vadd.f32 %v1201, %v1221
        %v1298 = vadd.f32 %v1202, %v1226
        %v1299 = vadd.f32 %v1203, %v1231
        %v1300 = vadd.f32 %v1204, %v1236
        %v1301 = vadd.f32 %v1205, %v1241
        %v1302 = vadd.f32 %v1206, %v1246
        %v1303 = vadd.f32 %v1207, %v1251
        %v1304 = vadd.f32 %v1208, %v1256
        %v1305 = vadd.f32 %v1209, %v1261
        %v1306 = vadd.f32 %v1210, %v1266
        %v1307 = vadd.f32 %v1211, %v1271
        %v1308 = vadd.f32 %v1212, %v1276
        %v1309 = vadd.f32 %v1213, %v1281
        %v1310 = vadd.f32 %v1214, %v1286
        %v1311 = vadd.f32 %v1215, %v1291
        %v1312 = vadd.f32 %v1216, %v1296
        %vm1313 = vcmask 7168
        %1314 = vst.msk [vmem:[#allocation3] sm:$0xff] %vm1313, %v1297
        %1315 = vst.msk [vmem:[#allocation3 + $0x8] sm:$0xff] %vm1313, %v1298
        %1316 = vst.msk [vmem:[#allocation3 + $0x10] sm:$0xff] %vm1313, %v1299
        %1317 = vst.msk [vmem:[#allocation3 + $0x18] sm:$0xff] %vm1313, %v1300
        %1318 = vst.msk [vmem:[#allocation3 + $0x20] sm:$0xff] %vm1313, %v1301
        %1319 = vst.msk [vmem:[#allocation3 + $0x28] sm:$0xff] %vm1313, %v1302
        %1320 = vst.msk [vmem:[#allocation3 + $0x30] sm:$0xff] %vm1313, %v1303
        %1321 = vst.msk [vmem:[#allocation3 + $0x38] sm:$0xff] %vm1313, %v1304
        %1322 = vst.msk [vmem:[#allocation3 + $0x40] sm:$0xff] %vm1313, %v1305
        %1323 = vst.msk [vmem:[#allocation3 + $0x48] sm:$0xff] %vm1313, %v1306
        %1324 = vst.msk [vmem:[#allocation3 + $0x50] sm:$0xff] %vm1313, %v1307
        %1325 = vst.msk [vmem:[#allocation3 + $0x58] sm:$0xff] %vm1313, %v1308
        %1326 = vst.msk [vmem:[#allocation3 + $0x60] sm:$0xff] %vm1313, %v1309
        %1327 = vst.msk [vmem:[#allocation3 + $0x68] sm:$0xff] %vm1313, %v1310
        %1328 = vst.msk [vmem:[#allocation3 + $0x70] sm:$0xff] %vm1313, %v1311
        %1329 = vst.msk [vmem:[#allocation3 + $0x78] sm:$0xff] %vm1313, %v1312
        %v1330 = vld [vmem:[#allocation4] sm:$0xff]
        %v1331 = vld [vmem:[#allocation4 + $0x8] sm:$0xff]
        %v1332 = vld [vmem:[#allocation4 + $0x10] sm:$0xff]
        %v1333 = vld [vmem:[#allocation4 + $0x18] sm:$0xff]
        %v1334 = vld [vmem:[#allocation4 + $0x20] sm:$0xff]
        %v1335 = vld [vmem:[#allocation4 + $0x28] sm:$0xff]
        %v1336 = vld [vmem:[#allocation4 + $0x30] sm:$0xff]
        %v1337 = vld [vmem:[#allocation4 + $0x38] sm:$0xff]
        %v1338 = vld [vmem:[#allocation4 + $0x40] sm:$0xff]
        %v1339 = vld [vmem:[#allocation4 + $0x48] sm:$0xff]
        %v1340 = vld [vmem:[#allocation4 + $0x50] sm:$0xff]
        %v1341 = vld [vmem:[#allocation4 + $0x58] sm:$0xff]
        %v1342 = vld [vmem:[#allocation4 + $0x60] sm:$0xff]
        %v1343 = vld [vmem:[#allocation4 + $0x68] sm:$0xff]
        %v1344 = vld [vmem:[#allocation4 + $0x70] sm:$0xff]
        %v1345 = vld [vmem:[#allocation4 + $0x78] sm:$0xff]
        %1347 = vset.pattern.permute.xlu0 0
        %1348 = vperm.xlu0 %1347, %v882
        %v1349 = vpop.permute.xlu0 %1348
        %1352 = vset.pattern.permute.xlu0 0
        %1353 = vperm.xlu0 %1352, %v884
        %v1354 = vpop.permute.xlu0 %1353
        %1357 = vset.pattern.permute.xlu0 0
        %1358 = vperm.xlu0 %1357, %v886
        %v1359 = vpop.permute.xlu0 %1358
        %1362 = vset.pattern.permute.xlu0 0
        %1363 = vperm.xlu0 %1362, %v888
        %v1364 = vpop.permute.xlu0 %1363
        %1367 = vset.pattern.permute.xlu0 0
        %1368 = vperm.xlu0 %1367, %v890
        %v1369 = vpop.permute.xlu0 %1368
        %1372 = vset.pattern.permute.xlu0 0
        %1373 = vperm.xlu0 %1372, %v892
        %v1374 = vpop.permute.xlu0 %1373
        %1377 = vset.pattern.permute.xlu0 0
        %1378 = vperm.xlu0 %1377, %v894
        %v1379 = vpop.permute.xlu0 %1378
        %1382 = vset.pattern.permute.xlu0 0
        %1383 = vperm.xlu0 %1382, %v896
        %v1384 = vpop.permute.xlu0 %1383
        %1387 = vset.pattern.permute.xlu0 0
        %1388 = vperm.xlu0 %1387, %v898
        %v1389 = vpop.permute.xlu0 %1388
        %1392 = vset.pattern.permute.xlu0 0
        %1393 = vperm.xlu0 %1392, %v900
        %v1394 = vpop.permute.xlu0 %1393
        %1397 = vset.pattern.permute.xlu0 0
        %1398 = vperm.xlu0 %1397, %v902
        %v1399 = vpop.permute.xlu0 %1398
        %1402 = vset.pattern.permute.xlu0 0
        %1403 = vperm.xlu0 %1402, %v904
        %v1404 = vpop.permute.xlu0 %1403
        %1407 = vset.pattern.permute.xlu0 0
        %1408 = vperm.xlu0 %1407, %v906
        %v1409 = vpop.permute.xlu0 %1408
        %1412 = vset.pattern.permute.xlu0 0
        %1413 = vperm.xlu0 %1412, %v908
        %v1414 = vpop.permute.xlu0 %1413
        %1417 = vset.pattern.permute.xlu0 0
        %1418 = vperm.xlu0 %1417, %v910
        %v1419 = vpop.permute.xlu0 %1418
        %1422 = vset.pattern.permute.xlu0 0
        %1423 = vperm.xlu0 %1422, %v912
        %v1424 = vpop.permute.xlu0 %1423
        %v1426 = vmul.f32 %v1349, %v1330
        %v1427 = vmul.f32 %v1354, %v1331
        %v1428 = vmul.f32 %v1359, %v1332
        %v1429 = vmul.f32 %v1364, %v1333
        %v1430 = vmul.f32 %v1369, %v1334
        %v1431 = vmul.f32 %v1374, %v1335
        %v1432 = vmul.f32 %v1379, %v1336
        %v1433 = vmul.f32 %v1384, %v1337
        %v1434 = vmul.f32 %v1389, %v1338
        %v1435 = vmul.f32 %v1394, %v1339
        %v1436 = vmul.f32 %v1399, %v1340
        %v1437 = vmul.f32 %v1404, %v1341
        %v1438 = vmul.f32 %v1409, %v1342
        %v1439 = vmul.f32 %v1414, %v1343
        %v1440 = vmul.f32 %v1419, %v1344
        %v1441 = vmul.f32 %v1424, %v1345
        %v1442 = vld [vmem:[#allocation11] sm:$0xff]
        %v1443 = vld [vmem:[#allocation11 + $0x8] sm:$0xff]
        %v1444 = vld [vmem:[#allocation11 + $0x10] sm:$0xff]
        %v1445 = vld [vmem:[#allocation11 + $0x18] sm:$0xff]
        %v1446 = vld [vmem:[#allocation11 + $0x20] sm:$0xff]
        %v1447 = vld [vmem:[#allocation11 + $0x28] sm:$0xff]
        %v1448 = vld [vmem:[#allocation11 + $0x30] sm:$0xff]
        %v1449 = vld [vmem:[#allocation11 + $0x38] sm:$0xff]
        %v1450 = vld [vmem:[#allocation11 + $0x40] sm:$0xff]
        %v1451 = vld [vmem:[#allocation11 + $0x48] sm:$0xff]
        %v1452 = vld [vmem:[#allocation11 + $0x50] sm:$0xff]
        %v1453 = vld [vmem:[#allocation11 + $0x58] sm:$0xff]
        %v1454 = vld [vmem:[#allocation11 + $0x60] sm:$0xff]
        %v1455 = vld [vmem:[#allocation11 + $0x68] sm:$0xff]
        %v1456 = vld [vmem:[#allocation11 + $0x70] sm:$0xff]
        %v1457 = vld [vmem:[#allocation11 + $0x78] sm:$0xff]
        %v1458 = vld [vmem:[#allocation11 + $0x80] sm:$0xff]
        %v1459 = vld [vmem:[#allocation11 + $0x88] sm:$0xff]
        %v1460 = vld [vmem:[#allocation11 + $0x90] sm:$0xff]
        %v1461 = vld [vmem:[#allocation11 + $0x98] sm:$0xff]
        %v1462 = vld [vmem:[#allocation11 + $0xa0] sm:$0xff]
        %v1463 = vld [vmem:[#allocation11 + $0xa8] sm:$0xff]
        %v1464 = vld [vmem:[#allocation11 + $0xb0] sm:$0xff]
        %v1465 = vld [vmem:[#allocation11 + $0xb8] sm:$0xff]
        %v1466 = vld [vmem:[#allocation11 + $0xc0] sm:$0xff]
        %v1467 = vld [vmem:[#allocation11 + $0xc8] sm:$0xff]
        %v1468 = vld [vmem:[#allocation11 + $0xd0] sm:$0xff]
        %v1469 = vld [vmem:[#allocation11 + $0xd8] sm:$0xff]
        %v1470 = vld [vmem:[#allocation11 + $0xe0] sm:$0xff]
        %v1471 = vld [vmem:[#allocation11 + $0xe8] sm:$0xff]
        %v1472 = vld [vmem:[#allocation11 + $0xf0] sm:$0xff]
        %v1473 = vld [vmem:[#allocation11 + $0xf8] sm:$0xff]
        %v1474 = vld [vmem:[#allocation11 + $0x100] sm:$0xff]
        %v1475 = vld [vmem:[#allocation11 + $0x108] sm:$0xff]
        %v1476 = vld [vmem:[#allocation11 + $0x110] sm:$0xff]
        %v1477 = vld [vmem:[#allocation11 + $0x118] sm:$0xff]
        %v1478 = vld [vmem:[#allocation11 + $0x120] sm:$0xff]
        %v1479 = vld [vmem:[#allocation11 + $0x128] sm:$0xff]
        %v1480 = vld [vmem:[#allocation11 + $0x130] sm:$0xff]
        %v1481 = vld [vmem:[#allocation11 + $0x138] sm:$0xff]
        %v1482 = vld [vmem:[#allocation11 + $0x140] sm:$0xff]
        %v1483 = vld [vmem:[#allocation11 + $0x148] sm:$0xff]
        %v1484 = vld [vmem:[#allocation11 + $0x150] sm:$0xff]
        %v1485 = vld [vmem:[#allocation11 + $0x158] sm:$0xff]
        %v1486 = vld [vmem:[#allocation11 + $0x160] sm:$0xff]
        %v1487 = vld [vmem:[#allocation11 + $0x168] sm:$0xff]
        %v1488 = vld [vmem:[#allocation11 + $0x170] sm:$0xff]
        %v1489 = vld [vmem:[#allocation11 + $0x178] sm:$0xff]
        %v1490 = vld [vmem:[#allocation11 + $0x180] sm:$0xff]
        %v1491 = vld [vmem:[#allocation11 + $0x188] sm:$0xff]
        %v1492 = vld [vmem:[#allocation11 + $0x190] sm:$0xff]
        %v1493 = vld [vmem:[#allocation11 + $0x198] sm:$0xff]
        %v1494 = vld [vmem:[#allocation11 + $0x1a0] sm:$0xff]
        %v1495 = vld [vmem:[#allocation11 + $0x1a8] sm:$0xff]
        %v1496 = vld [vmem:[#allocation11 + $0x1b0] sm:$0xff]
        %v1497 = vld [vmem:[#allocation11 + $0x1b8] sm:$0xff]
        %v1498 = vld [vmem:[#allocation11 + $0x1c0] sm:$0xff]
        %v1499 = vld [vmem:[#allocation11 + $0x1c8] sm:$0xff]
        %v1500 = vld [vmem:[#allocation11 + $0x1d0] sm:$0xff]
        %v1501 = vld [vmem:[#allocation11 + $0x1d8] sm:$0xff]
        %v1502 = vld [vmem:[#allocation11 + $0x1e0] sm:$0xff]
        %v1503 = vld [vmem:[#allocation11 + $0x1e8] sm:$0xff]
        %v1504 = vld [vmem:[#allocation11 + $0x1f0] sm:$0xff]
        %v1505 = vld [vmem:[#allocation11 + $0x1f8] sm:$0xff]
        %1506 = vmatprep.subr.mxu0 0.0
        %1507 = vmatpush1.msra.mxu0 %v1442
        %1508 = vmatprep.subr.mxu0 0.0
        %1509 = vmatpush1.msra.mxu0 %v1443
        %1510 = vmatprep.subr.mxu0 0.0
        %1511 = vmatpush1.msra.mxu0 %v1444
        %1512 = vmatprep.subr.mxu0 0.0
        %1513 = vmatpush1.msra.mxu0 %v1445
        %1514 = vmatprep.subr.mxu0 0.0
        %1515 = vmatpush1.msra.mxu0 %v1446
        %1516 = vmatprep.subr.mxu0 0.0
        %1517 = vmatpush1.msra.mxu0 %v1447
        %1518 = vmatprep.subr.mxu0 0.0
        %1519 = vmatpush1.msra.mxu0 %v1448
        %1520 = vmatprep.subr.mxu0 0.0
        %1521 = vmatpush1.msra.mxu0 %v1449
        %1522 = vmatprep.subr.mxu0 0.0
        %1523 = vmatpush1.msra.mxu0 %v1450
        %1524 = vmatprep.subr.mxu0 0.0
        %1525 = vmatpush1.msra.mxu0 %v1451
        %1526 = vmatprep.subr.mxu0 0.0
        %1527 = vmatpush1.msra.mxu0 %v1452
        %1528 = vmatprep.subr.mxu0 0.0
        %1529 = vmatpush1.msra.mxu0 %v1453
        %1530 = vmatprep.subr.mxu0 0.0
        %1531 = vmatpush1.msra.mxu0 %v1454
        %1532 = vmatprep.subr.mxu0 0.0
        %1533 = vmatpush1.msra.mxu0 %v1455
        %1534 = vmatprep.subr.mxu0 0.0
        %1535 = vmatpush1.msra.mxu0 %v1456
        %1536 = vmatprep.subr.mxu0 0.0
        %1537 = vmatpush1.msra.mxu0 %v1457
        %1538 = vmatprep.subr.mxu0 0.0
        %1539 = vmatpush1.msra.mxu0 %v1458
        %1540 = vmatprep.subr.mxu0 0.0
        %1541 = vmatpush1.msra.mxu0 %v1459
        %1542 = vmatprep.subr.mxu0 0.0
        %1543 = vmatpush1.msra.mxu0 %v1460
        %1544 = vmatprep.subr.mxu0 0.0
        %1545 = vmatpush1.msra.mxu0 %v1461
        %1546 = vmatprep.subr.mxu0 0.0
        %1547 = vmatpush1.msra.mxu0 %v1462
        %1548 = vmatprep.subr.mxu0 0.0
        %1549 = vmatpush1.msra.mxu0 %v1463
        %1550 = vmatprep.subr.mxu0 0.0
        %1551 = vmatpush1.msra.mxu0 %v1464
        %1552 = vmatprep.subr.mxu0 0.0
        %1553 = vmatpush1.msra.mxu0 %v1465
        %1554 = vmatprep.subr.mxu0 0.0
        %1555 = vmatpush1.msra.mxu0 %v1466
        %1556 = vmatprep.subr.mxu0 0.0
        %1557 = vmatpush1.msra.mxu0 %v1467
        %1558 = vmatprep.subr.mxu0 0.0
        %1559 = vmatpush1.msra.mxu0 %v1468
        %1560 = vmatprep.subr.mxu0 0.0
        %1561 = vmatpush1.msra.mxu0 %v1469
        %1562 = vmatprep.subr.mxu0 0.0
        %1563 = vmatpush1.msra.mxu0 %v1470
        %1564 = vmatprep.subr.mxu0 0.0
        %1565 = vmatpush1.msra.mxu0 %v1471
        %1566 = vmatprep.subr.mxu0 0.0
        %1567 = vmatpush1.msra.mxu0 %v1472
        %1568 = vmatprep.subr.mxu0 0.0
        %1569 = vmatpush1.msra.mxu0 %v1473
        %1570 = vmatprep.mubr.f32.mxu0 %v1060
        %1571 = vmatmul.mubr.f32.gmra.mrb[0].mxu0 %v1058
        %v1572 = vpop.f32.mrb[0].mxu0
        %v1573 = vadd.f32 0.0, %v1572
        %v1574 = vpop.f32.mrb[0].mxu0
        %1575 = vmatprep.mubr.f32.mxu0 %v1068
        %1576 = vmatmul.mubr.f32.gmra.mrb[0].mxu0 %v1066
        %v1577 = vpop.f32.mrb[0].mxu0
        %v1578 = vadd.f32 0.0, %v1577
        %v1579 = vpop.f32.mrb[0].mxu0
        %1580 = vmatprep.mubr.f32.mxu0 %v1076
        %1581 = vmatmul.mubr.f32.gmra.mrb[0].mxu0 %v1074
        %v1582 = vpop.f32.mrb[0].mxu0
        %v1583 = vadd.f32 0.0, %v1582
        %v1584 = vpop.f32.mrb[0].mxu0
        %1585 = vmatprep.mubr.f32.mxu0 %v1084
        %1586 = vmatmul.mubr.f32.gmra.mrb[0].mxu0 %v1082
        %v1587 = vpop.f32.mrb[0].mxu0
        %v1588 = vadd.f32 0.0, %v1587
        %v1589 = vpop.f32.mrb[0].mxu0
        %1590 = vmatprep.mubr.f32.mxu0 %v1092
        %1591 = vmatmul.mubr.f32.gmra.mrb[0].mxu0 %v1090
        %v1592 = vpop.f32.mrb[0].mxu0
        %v1593 = vadd.f32 0.0, %v1592
        %v1594 = vpop.f32.mrb[0].mxu0
        %1595 = vmatprep.mubr.f32.mxu0 %v1100
        %1596 = vmatmul.mubr.f32.gmra.mrb[0].mxu0 %v1098
        %v1597 = vpop.f32.mrb[0].mxu0
        %v1598 = vadd.f32 0.0, %v1597
        %v1599 = vpop.f32.mrb[0].mxu0
        %1600 = vmatprep.mubr.f32.mxu0 %v1108
        %1601 = vmatmul.mubr.f32.gmra.mrb[0].mxu0 %v1106
        %v1602 = vpop.f32.mrb[0].mxu0
        %v1603 = vadd.f32 0.0, %v1602
        %v1604 = vpop.f32.mrb[0].mxu0
        %1605 = vmatprep.mubr.f32.mxu0 %v1116
        %1606 = vmatmul.mubr.f32.gmra.mrb[0].mxu0 %v1114
        %v1607 = vpop.f32.mrb[0].mxu0
        %v1608 = vadd.f32 0.0, %v1607
        %v1609 = vpop.f32.mrb[0].mxu0
        %1610 = vmatprep.mubr.f32.mxu0 %v1124
        %1611 = vmatmul.mubr.f32.gmra.mrb[0].mxu0 %v1122
        %v1612 = vpop.f32.mrb[0].mxu0
        %v1613 = vadd.f32 0.0, %v1612
        %v1614 = vpop.f32.mrb[0].mxu0
        %1615 = vmatprep.mubr.f32.mxu0 %v1132
        %1616 = vmatmul.mubr.f32.gmra.mrb[0].mxu0 %v1130
        %v1617 = vpop.f32.mrb[0].mxu0
        %v1618 = vadd.f32 0.0, %v1617
        %v1619 = vpop.f32.mrb[0].mxu0
        %1620 = vmatprep.mubr.f32.mxu0 %v1140
        %1621 = vmatmul.mubr.f32.gmra.mrb[0].mxu0 %v1138
        %v1622 = vpop.f32.mrb[0].mxu0
        %v1623 = vadd.f32 0.0, %v1622
        %v1624 = vpop.f32.mrb[0].mxu0
        %1625 = vmatprep.mubr.f32.mxu0 %v1148
        %1626 = vmatmul.mubr.f32.gmra.mrb[0].mxu0 %v1146
        %v1627 = vpop.f32.mrb[0].mxu0
        %v1628 = vadd.f32 0.0, %v1627
        %v1629 = vpop.f32.mrb[0].mxu0
        %1630 = vmatprep.mubr.f32.mxu0 %v1156
        %1631 = vmatmul.mubr.f32.gmra.mrb[0].mxu0 %v1154
        %v1632 = vpop.f32.mrb[0].mxu0
        %v1633 = vadd.f32 0.0, %v1632
        %v1634 = vpop.f32.mrb[0].mxu0
        %1635 = vmatprep.mubr.f32.mxu0 %v1164
        %1636 = vmatmul.mubr.f32.gmra.mrb[0].mxu0 %v1162
        %v1637 = vpop.f32.mrb[0].mxu0
        %v1638 = vadd.f32 0.0, %v1637
        %v1639 = vpop.f32.mrb[0].mxu0
        %1640 = vmatprep.mubr.f32.mxu0 %v1172
        %1641 = vmatmul.mubr.f32.gmra.mrb[0].mxu0 %v1170
        %v1642 = vpop.f32.mrb[0].mxu0
        %v1643 = vadd.f32 0.0, %v1642
        %v1644 = vpop.f32.mrb[0].mxu0
        %1645 = vmatprep.mubr.f32.mxu0 %v1180
        %1646 = vmatmul.mubr.f32.gmra.mrb[0].mxu0 %v1178
        %v1647 = vpop.f32.mrb[0].mxu0
        %v1648 = vadd.f32 0.0, %v1647
        %v1649 = vpop.f32.mrb[0].mxu0
        %1650 = vdwg.mxu0
        %1651 = vmatprep.subr.mxu0 0.0
        %1652 = vmatpush1.msra.mxu0 %v1474
        %1653 = vmatprep.subr.mxu0 0.0
        %1654 = vmatpush1.msra.mxu0 %v1475
        %1655 = vmatprep.subr.mxu0 0.0
        %1656 = vmatpush1.msra.mxu0 %v1476
        %1657 = vmatprep.subr.mxu0 0.0
        %1658 = vmatpush1.msra.mxu0 %v1477
        %1659 = vmatprep.subr.mxu0 0.0
        %1660 = vmatpush1.msra.mxu0 %v1478
        %1661 = vmatprep.subr.mxu0 0.0
        %1662 = vmatpush1.msra.mxu0 %v1479
        %1663 = vmatprep.subr.mxu0 0.0
        %1664 = vmatpush1.msra.mxu0 %v1480
        %1665 = vmatprep.subr.mxu0 0.0
        %1666 = vmatpush1.msra.mxu0 %v1481
        %1667 = vmatprep.subr.mxu0 0.0
        %1668 = vmatpush1.msra.mxu0 %v1482
        %1669 = vmatprep.subr.mxu0 0.0
        %1670 = vmatpush1.msra.mxu0 %v1483
        %1671 = vmatprep.subr.mxu0 0.0
        %1672 = vmatpush1.msra.mxu0 %v1484
        %1673 = vmatprep.subr.mxu0 0.0
        %1674 = vmatpush1.msra.mxu0 %v1485
        %1675 = vmatprep.subr.mxu0 0.0
        %1676 = vmatpush1.msra.mxu0 %v1486
        %1677 = vmatprep.subr.mxu0 0.0
        %1678 = vmatpush1.msra.mxu0 %v1487
        %1679 = vmatprep.subr.mxu0 0.0
        %1680 = vmatpush1.msra.mxu0 %v1488
        %1681 = vmatprep.subr.mxu0 0.0
        %1682 = vmatpush1.msra.mxu0 %v1489
        %1683 = vmatprep.subr.mxu0 0.0
        %1684 = vmatpush1.msra.mxu0 %v1490
        %1685 = vmatprep.subr.mxu0 0.0
        %1686 = vmatpush1.msra.mxu0 %v1491
        %1687 = vmatprep.subr.mxu0 0.0
        %1688 = vmatpush1.msra.mxu0 %v1492
        %1689 = vmatprep.subr.mxu0 0.0
        %1690 = vmatpush1.msra.mxu0 %v1493
        %1691 = vmatprep.subr.mxu0 0.0
        %1692 = vmatpush1.msra.mxu0 %v1494
        %1693 = vmatprep.subr.mxu0 0.0
        %1694 = vmatpush1.msra.mxu0 %v1495
        %1695 = vmatprep.subr.mxu0 0.0
        %1696 = vmatpush1.msra.mxu0 %v1496
        %1697 = vmatprep.subr.mxu0 0.0
        %1698 = vmatpush1.msra.mxu0 %v1497
        %1699 = vmatprep.subr.mxu0 0.0
        %1700 = vmatpush1.msra.mxu0 %v1498
        %1701 = vmatprep.subr.mxu0 0.0
        %1702 = vmatpush1.msra.mxu0 %v1499
        %1703 = vmatprep.subr.mxu0 0.0
        %1704 = vmatpush1.msra.mxu0 %v1500
        %1705 = vmatprep.subr.mxu0 0.0
        %1706 = vmatpush1.msra.mxu0 %v1501
        %1707 = vmatprep.subr.mxu0 0.0
        %1708 = vmatpush1.msra.mxu0 %v1502
        %1709 = vmatprep.subr.mxu0 0.0
        %1710 = vmatpush1.msra.mxu0 %v1503
        %1711 = vmatprep.subr.mxu0 0.0
        %1712 = vmatpush1.msra.mxu0 %v1504
        %1713 = vmatprep.subr.mxu0 0.0
        %1714 = vmatpush1.msra.mxu0 %v1505
        %1715 = vmatprep.mubr.f32.mxu0 %v1064
        %1716 = vmatmul.mubr.f32.gmra.mrb[0].mxu0 %v1062
        %v1717 = vpop.f32.mrb[0].mxu0
        %v1718 = vadd.f32 %v1573, %v1717
        %v1719 = vpop.f32.mrb[0].mxu0
        %1720 = vmatprep.mubr.f32.mxu0 %v1072
        %1721 = vmatmul.mubr.f32.gmra.mrb[0].mxu0 %v1070
        %v1722 = vpop.f32.mrb[0].mxu0
        %v1723 = vadd.f32 %v1578, %v1722
        %v1724 = vpop.f32.mrb[0].mxu0
        %1725 = vmatprep.mubr.f32.mxu0 %v1080
        %1726 = vmatmul.mubr.f32.gmra.mrb[0].mxu0 %v1078
        %v1727 = vpop.f32.mrb[0].mxu0
        %v1728 = vadd.f32 %v1583, %v1727
        %v1729 = vpop.f32.mrb[0].mxu0
        %1730 = vmatprep.mubr.f32.mxu0 %v1088
        %1731 = vmatmul.mubr.f32.gmra.mrb[0].mxu0 %v1086
        %v1732 = vpop.f32.mrb[0].mxu0
        %v1733 = vadd.f32 %v1588, %v1732
        %v1734 = vpop.f32.mrb[0].mxu0
        %1735 = vmatprep.mubr.f32.mxu0 %v1096
        %1736 = vmatmul.mubr.f32.gmra.mrb[0].mxu0 %v1094
        %v1737 = vpop.f32.mrb[0].mxu0
        %v1738 = vadd.f32 %v1593, %v1737
        %v1739 = vpop.f32.mrb[0].mxu0
        %1740 = vmatprep.mubr.f32.mxu0 %v1104
        %1741 = vmatmul.mubr.f32.gmra.mrb[0].mxu0 %v1102
        %v1742 = vpop.f32.mrb[0].mxu0
        %v1743 = vadd.f32 %v1598, %v1742
        %v1744 = vpop.f32.mrb[0].mxu0
        %1745 = vmatprep.mubr.f32.mxu0 %v1112
        %1746 = vmatmul.mubr.f32.gmra.mrb[0].mxu0 %v1110
        %v1747 = vpop.f32.mrb[0].mxu0
        %v1748 = vadd.f32 %v1603, %v1747
        %v1749 = vpop.f32.mrb[0].mxu0
        %1750 = vmatprep.mubr.f32.mxu0 %v1120
        %1751 = vmatmul.mubr.f32.gmra.mrb[0].mxu0 %v1118
        %v1752 = vpop.f32.mrb[0].mxu0
        %v1753 = vadd.f32 %v1608, %v1752
        %v1754 = vpop.f32.mrb[0].mxu0
        %1755 = vmatprep.mubr.f32.mxu0 %v1128
        %1756 = vmatmul.mubr.f32.gmra.mrb[0].mxu0 %v1126
        %v1757 = vpop.f32.mrb[0].mxu0
        %v1758 = vadd.f32 %v1613, %v1757
        %v1759 = vpop.f32.mrb[0].mxu0
        %1760 = vmatprep.mubr.f32.mxu0 %v1136
        %1761 = vmatmul.mubr.f32.gmra.mrb[0].mxu0 %v1134
        %v1762 = vpop.f32.mrb[0].mxu0
        %v1763 = vadd.f32 %v1618, %v1762
        %v1764 = vpop.f32.mrb[0].mxu0
        %1765 = vmatprep.mubr.f32.mxu0 %v1144
        %1766 = vmatmul.mubr.f32.gmra.mrb[0].mxu0 %v1142
        %v1767 = vpop.f32.mrb[0].mxu0
        %v1768 = vadd.f32 %v1623, %v1767
        %v1769 = vpop.f32.mrb[0].mxu0
        %1770 = vmatprep.mubr.f32.mxu0 %v1152
        %1771 = vmatmul.mubr.f32.gmra.mrb[0].mxu0 %v1150
        %v1772 = vpop.f32.mrb[0].mxu0
        %v1773 = vadd.f32 %v1628, %v1772
        %v1774 = vpop.f32.mrb[0].mxu0
        %1775 = vmatprep.mubr.f32.mxu0 %v1160
        %1776 = vmatmul.mubr.f32.gmra.mrb[0].mxu0 %v1158
        %v1777 = vpop.f32.mrb[0].mxu0
        %v1778 = vadd.f32 %v1633, %v1777
        %v1779 = vpop.f32.mrb[0].mxu0
        %1780 = vmatprep.mubr.f32.mxu0 %v1168
        %1781 = vmatmul.mubr.f32.gmra.mrb[0].mxu0 %v1166
        %v1782 = vpop.f32.mrb[0].mxu0
        %v1783 = vadd.f32 %v1638, %v1782
        %v1784 = vpop.f32.mrb[0].mxu0
        %1785 = vmatprep.mubr.f32.mxu0 %v1176
        %1786 = vmatmul.mubr.f32.gmra.mrb[0].mxu0 %v1174
        %v1787 = vpop.f32.mrb[0].mxu0
        %v1788 = vadd.f32 %v1643, %v1787
        %v1789 = vpop.f32.mrb[0].mxu0
        %1790 = vmatprep.mubr.f32.mxu0 %v1184
        %1791 = vmatmul.mubr.f32.gmra.mrb[0].mxu0 %v1182
        %v1792 = vpop.f32.mrb[0].mxu0
        %v1793 = vadd.f32 %v1648, %v1792
        %v1794 = vpop.f32.mrb[0].mxu0
        %1795 = vdwg.mxu0
        %v1796 = vadd.f32 %v1426, %v1718
        %v1797 = vadd.f32 %v1427, %v1723
        %v1798 = vadd.f32 %v1428, %v1728
        %v1799 = vadd.f32 %v1429, %v1733
        %v1800 = vadd.f32 %v1430, %v1738
        %v1801 = vadd.f32 %v1431, %v1743
        %v1802 = vadd.f32 %v1432, %v1748
        %v1803 = vadd.f32 %v1433, %v1753
        %v1804 = vadd.f32 %v1434, %v1758
        %v1805 = vadd.f32 %v1435, %v1763
        %v1806 = vadd.f32 %v1436, %v1768
        %v1807 = vadd.f32 %v1437, %v1773
        %v1808 = vadd.f32 %v1438, %v1778
        %v1809 = vadd.f32 %v1439, %v1783
        %v1810 = vadd.f32 %v1440, %v1788
        %v1811 = vadd.f32 %v1441, %v1793
        %1812 = vst [vmem:[#allocation4] sm:$0xff] %v1796
        %1813 = vst [vmem:[#allocation4 + $0x8] sm:$0xff] %v1797
        %1814 = vst [vmem:[#allocation4 + $0x10] sm:$0xff] %v1798
        %1815 = vst [vmem:[#allocation4 + $0x18] sm:$0xff] %v1799
        %1816 = vst [vmem:[#allocation4 + $0x20] sm:$0xff] %v1800
        %1817 = vst [vmem:[#allocation4 + $0x28] sm:$0xff] %v1801
        %1818 = vst [vmem:[#allocation4 + $0x30] sm:$0xff] %v1802
        %1819 = vst [vmem:[#allocation4 + $0x38] sm:$0xff] %v1803
        %1820 = vst [vmem:[#allocation4 + $0x40] sm:$0xff] %v1804
        %1821 = vst [vmem:[#allocation4 + $0x48] sm:$0xff] %v1805
        %1822 = vst [vmem:[#allocation4 + $0x50] sm:$0xff] %v1806
        %1823 = vst [vmem:[#allocation4 + $0x58] sm:$0xff] %v1807
        %1824 = vst [vmem:[#allocation4 + $0x60] sm:$0xff] %v1808
        %1825 = vst [vmem:[#allocation4 + $0x68] sm:$0xff] %v1809
        %1826 = vst [vmem:[#allocation4 + $0x70] sm:$0xff] %v1810
        %1827 = vst [vmem:[#allocation4 + $0x78] sm:$0xff] %v1811
        %1828 = vst.msk [vmem:[#allocation2] sm:$0xff] %vm1313, %v849
        %1829 = vst.msk [vmem:[#allocation2 + $0x8] sm:$0xff] %vm1313, %v850
        %1830 = vst.msk [vmem:[#allocation2 + $0x10] sm:$0xff] %vm1313, %v851
        %1831 = vst.msk [vmem:[#allocation2 + $0x18] sm:$0xff] %vm1313, %v852
        %1832 = vst.msk [vmem:[#allocation2 + $0x20] sm:$0xff] %vm1313, %v853
        %1833 = vst.msk [vmem:[#allocation2 + $0x28] sm:$0xff] %vm1313, %v854
        %1834 = vst.msk [vmem:[#allocation2 + $0x30] sm:$0xff] %vm1313, %v855
        %1835 = vst.msk [vmem:[#allocation2 + $0x38] sm:$0xff] %vm1313, %v856
        %1836 = vst.msk [vmem:[#allocation2 + $0x40] sm:$0xff] %vm1313, %v857
        %1837 = vst.msk [vmem:[#allocation2 + $0x48] sm:$0xff] %vm1313, %v858
        %1838 = vst.msk [vmem:[#allocation2 + $0x50] sm:$0xff] %vm1313, %v859
        %1839 = vst.msk [vmem:[#allocation2 + $0x58] sm:$0xff] %vm1313, %v860
        %1840 = vst.msk [vmem:[#allocation2 + $0x60] sm:$0xff] %vm1313, %v861
        %1841 = vst.msk [vmem:[#allocation2 + $0x68] sm:$0xff] %vm1313, %v862
        %1842 = vst.msk [vmem:[#allocation2 + $0x70] sm:$0xff] %vm1313, %v863
        %1843 = vst.msk [vmem:[#allocation2 + $0x78] sm:$0xff] %vm1313, %v864
        // Predicated region
        $region49: #{tpu_custom_call.1} parent=31 // pred_check
          %p1844 = pneg %p250
        $region50: #{tpu_custom_call.1} parent=31 // pred_check_branch
          %1846 = sbr.rel (%p1844) target = $region52
        $region51: #{tpu_custom_call.1} parent=31 // pred_region
          %v1847 = vld [vmem:[#allocation3] sm:$0xff]
          %v1848 = vld [vmem:[#allocation3 + $0x8] sm:$0xff]
          %v1849 = vld [vmem:[#allocation3 + $0x10] sm:$0xff]
          %v1850 = vld [vmem:[#allocation3 + $0x18] sm:$0xff]
          %v1851 = vld [vmem:[#allocation3 + $0x20] sm:$0xff]
          %v1852 = vld [vmem:[#allocation3 + $0x28] sm:$0xff]
          %v1853 = vld [vmem:[#allocation3 + $0x30] sm:$0xff]
          %v1854 = vld [vmem:[#allocation3 + $0x38] sm:$0xff]
          %v1855 = vld [vmem:[#allocation3 + $0x40] sm:$0xff]
          %v1856 = vld [vmem:[#allocation3 + $0x48] sm:$0xff]
          %v1857 = vld [vmem:[#allocation3 + $0x50] sm:$0xff]
          %v1858 = vld [vmem:[#allocation3 + $0x58] sm:$0xff]
          %v1859 = vld [vmem:[#allocation3 + $0x60] sm:$0xff]
          %v1860 = vld [vmem:[#allocation3 + $0x68] sm:$0xff]
          %v1861 = vld [vmem:[#allocation3 + $0x70] sm:$0xff]
          %v1862 = vld [vmem:[#allocation3 + $0x78] sm:$0xff]
          %v1863 = vrcp.pop %v1847
          %v1864 = vrcp.pop %v1848
          %v1865 = vrcp.pop %v1849
          %v1866 = vrcp.pop %v1850
          %v1867 = vrcp.pop %v1851
          %v1868 = vrcp.pop %v1852
          %v1869 = vrcp.pop %v1853
          %v1870 = vrcp.pop %v1854
          %v1871 = vrcp.pop %v1855
          %v1872 = vrcp.pop %v1856
          %v1873 = vrcp.pop %v1857
          %v1874 = vrcp.pop %v1858
          %v1875 = vrcp.pop %v1859
          %v1876 = vrcp.pop %v1860
          %v1877 = vrcp.pop %v1861
          %v1878 = vrcp.pop %v1862
          %v1879 = vld [vmem:[#allocation4] sm:$0xff]
          %v1880 = vld [vmem:[#allocation4 + $0x8] sm:$0xff]
          %v1881 = vld [vmem:[#allocation4 + $0x10] sm:$0xff]
          %v1882 = vld [vmem:[#allocation4 + $0x18] sm:$0xff]
          %v1883 = vld [vmem:[#allocation4 + $0x20] sm:$0xff]
          %v1884 = vld [vmem:[#allocation4 + $0x28] sm:$0xff]
          %v1885 = vld [vmem:[#allocation4 + $0x30] sm:$0xff]
          %v1886 = vld [vmem:[#allocation4 + $0x38] sm:$0xff]
          %v1887 = vld [vmem:[#allocation4 + $0x40] sm:$0xff]
          %v1888 = vld [vmem:[#allocation4 + $0x48] sm:$0xff]
          %v1889 = vld [vmem:[#allocation4 + $0x50] sm:$0xff]
          %v1890 = vld [vmem:[#allocation4 + $0x58] sm:$0xff]
          %v1891 = vld [vmem:[#allocation4 + $0x60] sm:$0xff]
          %v1892 = vld [vmem:[#allocation4 + $0x68] sm:$0xff]
          %v1893 = vld [vmem:[#allocation4 + $0x70] sm:$0xff]
          %v1894 = vld [vmem:[#allocation4 + $0x78] sm:$0xff]
          %1896 = vset.pattern.permute.xlu0 0
          %1897 = vperm.xlu0 %1896, %v1863
          %v1898 = vpop.permute.xlu0 %1897
          %1901 = vset.pattern.permute.xlu0 0
          %1902 = vperm.xlu0 %1901, %v1864
          %v1903 = vpop.permute.xlu0 %1902
          %1906 = vset.pattern.permute.xlu0 0
          %1907 = vperm.xlu0 %1906, %v1865
          %v1908 = vpop.permute.xlu0 %1907
          %1911 = vset.pattern.permute.xlu0 0
          %1912 = vperm.xlu0 %1911, %v1866
          %v1913 = vpop.permute.xlu0 %1912
          %1916 = vset.pattern.permute.xlu0 0
          %1917 = vperm.xlu0 %1916, %v1867
          %v1918 = vpop.permute.xlu0 %1917
          %1921 = vset.pattern.permute.xlu0 0
          %1922 = vperm.xlu0 %1921, %v1868
          %v1923 = vpop.permute.xlu0 %1922
          %1926 = vset.pattern.permute.xlu0 0
          %1927 = vperm.xlu0 %1926, %v1869
          %v1928 = vpop.permute.xlu0 %1927
          %1931 = vset.pattern.permute.xlu0 0
          %1932 = vperm.xlu0 %1931, %v1870
          %v1933 = vpop.permute.xlu0 %1932
          %1936 = vset.pattern.permute.xlu0 0
          %1937 = vperm.xlu0 %1936, %v1871
          %v1938 = vpop.permute.xlu0 %1937
          %1941 = vset.pattern.permute.xlu0 0
          %1942 = vperm.xlu0 %1941, %v1872
          %v1943 = vpop.permute.xlu0 %1942
          %1946 = vset.pattern.permute.xlu0 0
          %1947 = vperm.xlu0 %1946, %v1873
          %v1948 = vpop.permute.xlu0 %1947
          %1951 = vset.pattern.permute.xlu0 0
          %1952 = vperm.xlu0 %1951, %v1874
          %v1953 = vpop.permute.xlu0 %1952
          %1956 = vset.pattern.permute.xlu0 0
          %1957 = vperm.xlu0 %1956, %v1875
          %v1958 = vpop.permute.xlu0 %1957
          %1961 = vset.pattern.permute.xlu0 0
          %1962 = vperm.xlu0 %1961, %v1876
          %v1963 = vpop.permute.xlu0 %1962
          %1966 = vset.pattern.permute.xlu0 0
          %1967 = vperm.xlu0 %1966, %v1877
          %v1968 = vpop.permute.xlu0 %1967
          %1971 = vset.pattern.permute.xlu0 0
          %1972 = vperm.xlu0 %1971, %v1878
          %v1973 = vpop.permute.xlu0 %1972
          %v1975 = vmul.f32 %v1879, %v1898
          %v1976 = vmul.f32 %v1880, %v1903
          %v1977 = vmul.f32 %v1881, %v1908
          %v1978 = vmul.f32 %v1882, %v1913
          %v1979 = vmul.f32 %v1883, %v1918
          %v1980 = vmul.f32 %v1884, %v1923
          %v1981 = vmul.f32 %v1885, %v1928
          %v1982 = vmul.f32 %v1886, %v1933
          %v1983 = vmul.f32 %v1887, %v1938
          %v1984 = vmul.f32 %v1888, %v1943
          %v1985 = vmul.f32 %v1889, %v1948
          %v1986 = vmul.f32 %v1890, %v1953
          %v1987 = vmul.f32 %v1891, %v1958
          %v1988 = vmul.f32 %v1892, %v1963
          %v1989 = vmul.f32 %v1893, %v1968
          %v1990 = vmul.f32 %v1894, %v1973
          %1991 = vst [vmem:[%s245] sm:$0xff] %v1975
          %1992 = vst [vmem:[%s245 + $0x8] sm:$0xff] %v1976
          %1993 = vst [vmem:[%s245 + $0x10] sm:$0xff] %v1977
          %1994 = vst [vmem:[%s245 + $0x18] sm:$0xff] %v1978
          %1995 = vst [vmem:[%s245 + $0x20] sm:$0xff] %v1979
          %1996 = vst [vmem:[%s245 + $0x28] sm:$0xff] %v1980
          %1997 = vst [vmem:[%s245 + $0x30] sm:$0xff] %v1981
          %1998 = vst [vmem:[%s245 + $0x38] sm:$0xff] %v1982
          %1999 = vst [vmem:[%s245 + $0x40] sm:$0xff] %v1983
          %2000 = vst [vmem:[%s245 + $0x48] sm:$0xff] %v1984
          %2001 = vst [vmem:[%s245 + $0x50] sm:$0xff] %v1985
          %2002 = vst [vmem:[%s245 + $0x58] sm:$0xff] %v1986
          %2003 = vst [vmem:[%s245 + $0x60] sm:$0xff] %v1987
          %2004 = vst [vmem:[%s245 + $0x68] sm:$0xff] %v1988
          %2005 = vst [vmem:[%s245 + $0x70] sm:$0xff] %v1989
          %2006 = vst [vmem:[%s245 + $0x78] sm:$0xff] %v1990
        $region52: #{tpu_custom_call.1} parent=31 // pred_fallthru
          _
        %s2007 = sand.u32 %s119, 1
        %s2008 = scalar_lea.sflag [#allocation8], %s2007
        %s2009 = sand.u32 %s119, 1
        %s2010 = smul.addr %s2009, 128
        %s2011 = scalar_lea.vmem [#allocation12], %s2010
        // Predicated region
        $region53: #{tpu_custom_call.1} parent=31 // pred_check
          %p2012 = pneg %p129
        $region54: #{tpu_custom_call.1} parent=31 // pred_check_branch
          %2014 = sbr.rel (%p2012) target = $region56
        $region55: #{tpu_custom_call.1} parent=31 // pred_region
          %s2015 = smul.u32 16, %s25
          %s2017 = ssub.s32 2048, 2048
          %2018 = vsyncadd %s2008, %s2017
          %s2019 = smul.addr %s2015, 128
          %s2020 = scalar_lea.hbm %s3, %s2019
          %s2021 = sshll.u32 %s2011, 4
          %s2022 = int_to_ptr.vmem [resolvable:$true] %s2021
          %2027 = dma.vmem_to_hbm [thread:$0]  %s2022, 2048, %s2020, %s2008, 128, 128, 8
        $region56: #{tpu_custom_call.1} parent=31 // pred_fallthru
          _
      $region32: #{tpu_custom_call.1} parent=5 // pred_fallthru
        _
      %p2028 = scmp.le.s32.totalorder 2, %s16
      // Predicated region
      $region57: #{tpu_custom_call.1} parent=5 // pred_check
        %p2029 = pneg %p2028
      $region58: #{tpu_custom_call.1} parent=5 // pred_check_branch
        %2031 = sbr.rel (%p2029) target = $region60
      $region59: #{tpu_custom_call.1} parent=5 // pred_region
        %s2032 = ssub.s32 %s16, 2
        // Predicated region
        $region61: #{tpu_custom_call.1} parent=59 // pred_check
          %p2033 = pneg %p135
        $region62: #{tpu_custom_call.1} parent=59 // pred_check_branch
          %2035 = sbr.rel (%p2033) target = $region64
        $region63: #{tpu_custom_call.1} parent=59 // pred_region
          %s2036 = sand.u32 %s120, 1
          %s2037 = scalar_lea.sflag [#allocation8], %s2036
          %s2038 = sand.u32 %s120, 1
          %s2039 = smul.addr %s2038, 128
          %s2040 = scalar_lea.vmem [#allocation12], %s2039
          %2041 = dma.done %s2037, 2048
        $region64: #{tpu_custom_call.1} parent=59 // pred_fallthru
          _
      $region60: #{tpu_custom_call.1} parent=5 // pred_fallthru
        _
    $region6: #{tpu_custom_call.1} parent=1 // loop_footer
      %s20 = sadd.s32 1, %s16
    $region7: #{tpu_custom_call.1} parent=1 // loop_footer_branch
      %15 = sbr.rel target = $region3
    $region8: #{tpu_custom_call.1} parent=1 // loop_exit
      _
    %2042 = vsyncpa [#allocation7], 1
    %s2043 = scalar_lea.sflag [#allocation7], 1
    %2044 = vsyncpa %s2043, 1
    %2045 = vsyncpa [#allocation10], 1
    %2046 = vsyncpa [#allocation8], 1
    %s2047 = scalar_lea.sflag [#allocation8], 1
    %2048 = vsyncpa %s2047, 1

</llo_original>
